<compile_context>
chip_gen: v7x
topology: tpu7x:2x2x1
jax: 0.10.0
libtpu: 0.0.40
codegen_flags: <defaults>
</compile_context>

<pallas_src>
from functools import partial

import jax
import jax.numpy as jnp
from jax.experimental import pallas as pl
from jax.experimental.pallas import tpu as pltpu


def ren_rollout_kernel(chunk_t, group, l, n_xi, m,
                       wxi_ref, fused_ref, xi0_ref, wproj_ref,
                       out_ref, xi_scratch):
    """Processes one time chunk of `chunk_t` steps.

    Lane layout of width W = n_xi + m + l is [xi_lin | u_lin | v].
    wxi_ref   : (n_xi, W)  rows of [ (E^-1 F)^T | C2^T | (C1/Lambda)^T ]
    fused_ref : (l, W)     row i = [ (E^-1 B1)[:,i] | D21[:,i] | D11[:,i]/Lambda ]
    xi0_ref   : (1, n_xi)  initial state (consumed only at grid step 0)
    wproj_ref : (chunk_t, W) pre-computed w_t @ Ww rows for this chunk
    out_ref   : (chunk_t, n_xi + m) packed [xi_next | u] per step
    xi_scratch: (1, n_xi)  xi carried across time chunks (grid iterations)
    """
    voff = n_xi + m

    @pl.when(pl.program_id(0) == 0)
    def _():
        xi_scratch[...] = xi0_ref[...]

    wxi = wxi_ref[...]        # resident weight slabs (loaded once per chunk)
    fused = fused_ref[...]

    def xi_matvec(xi):
        # (1, n_xi) @ (n_xi, W) on the VPU: rank-1 FMAs, pairwise-tree summed,
        # keeping the MXU off the serial per-step critical path.
        terms = [xi[:, k:k + 1] * wxi[k:k + 1, :] for k in range(n_xi)]
        while len(terms) > 1:
            nxt = [terms[j] + terms[j + 1] for j in range(0, len(terms) - 1, 2)]
            if len(terms) % 2:
                nxt.append(terms[-1])
            terms = nxt
        return terms[0]

    def group_body(g, xi):
        base = pl.multiple_of(g * group, group)
        wp_blk = wproj_ref[pl.ds(base, group), :]             # (group, W)
        rows = []
        for s in range(group):                                # unrolled steps
            proj = wp_blk[s:s + 1, :] + xi_matvec(xi)         # (1, W)
            # D11 is strictly lower triangular, so lane voff+i is final once
            # rows j < i have been applied: static 1-lane extract -> tanh ->
            # one full-width rank-1 FMA (covers both D11 and Weps terms).
            for i in range(l):
                e_i = jnp.tanh(proj[:, voff + i:voff + i + 1])    # (1, 1)
                proj = proj + e_i * fused[i:i + 1, :]             # VPU FMA
            rows.append(proj[:, :voff])                       # [xi_next | u]
            xi = proj[:, :n_xi]
        # Grouped store: one (group, n_xi+m) slab instead of `group` tiny
        # masked 1-row stores.
        out_ref[pl.ds(base, group), :] = jnp.concatenate(rows, axis=0)
        return xi

    xi_final = jax.lax.fori_loop(0, chunk_t // group, group_body,
                                 xi_scratch[...])
    xi_scratch[...] = xi_final


GROUP = 8              # steps per grouped output store (one vreg of sublanes)
MAX_CHUNK_STEPS = 512  # time-chunk size; sized conservatively for v7x VMEM


@jax.jit
def _ren_rollout(wxi, ww, fused, w_seq, xi0):
    T = w_seq.shape[0]
    n_xi, W = wxi.shape
    l = fused.shape[0]
    m = W - n_xi - l

    # Hoisted input projection: one batched matmul instead of T tiny ones.
    w_proj = jnp.dot(w_seq, ww, preferred_element_type=jnp.float32)   # (T, W)

    tg = -(-T // GROUP) * GROUP
    chunk = min(tg, MAX_CHUNK_STEPS)
    t_pad = -(-tg // chunk) * chunk
    if t_pad != T:
        w_proj = jnp.pad(w_proj, ((0, t_pad - T), (0, 0)))

    packed = pl.pallas_call(
        partial(ren_rollout_kernel, chunk, GROUP, l, n_xi, m),
        out_shape=jax.ShapeDtypeStruct((t_pad, n_xi + m), jnp.float32),
        grid=(t_pad // chunk,),
        in_specs=[
            pl.BlockSpec((n_xi, W), lambda c: (0, 0)),       # resident weights
            pl.BlockSpec((l, W), lambda c: (0, 0)),
            pl.BlockSpec((1, n_xi), lambda c: (0, 0)),
            pl.BlockSpec((chunk, W), lambda c: (c, 0)),      # streamed w_proj
        ],
        out_specs=pl.BlockSpec((chunk, n_xi + m), lambda c: (c, 0)),
        scratch_shapes=[pltpu.VMEM((1, n_xi), jnp.float32)],
        compiler_params=pltpu.CompilerParams(
            dimension_semantics=("arbitrary",),     # xi carried across chunks
            vmem_limit_bytes=16 * 1024 * 1024),
    )(wxi, fused, xi0, w_proj)

    return packed[:T, n_xi:], packed[:T, :n_xi]  # u_seq (T,m), xi_seq (T,n_xi)


class RENPallas:
    def __init__(self, n, m, n_xi, l, key):
        self.n, self.m, self.n_xi, self.l = n, m, n_xi, l
        self.epsilon = 0.001
        std = 1.0
        ks = jax.random.split(key, 7)
        self.X = jax.random.normal(ks[0], (2 * n_xi + l, 2 * n_xi + l), jnp.float32) * std
        self.Y = jax.random.normal(ks[1], (n_xi, n_xi), jnp.float32) * std
        self.B2 = jax.random.normal(ks[2], (n_xi, n), jnp.float32) * std
        self.C2 = jax.random.normal(ks[3], (m, n_xi), jnp.float32) * std
        self.D21 = jax.random.normal(ks[4], (m, l), jnp.float32) * std
        self.D22 = jax.random.normal(ks[5], (m, n), jnp.float32) * std
        self.D12 = jax.random.normal(ks[6], (l, n), jnp.float32) * std
        self.set_model_param()

    def set_model_param(self):
        n_xi, l = self.n_xi, self.l
        H = self.X.T @ self.X + self.epsilon * jnp.eye(2 * n_xi + l, dtype=jnp.float32)
        H11 = H[:n_xi, :n_xi]
        H21 = H[n_xi:n_xi + l, :n_xi]
        H22 = H[n_xi:n_xi + l, n_xi:n_xi + l]
        H31 = H[n_xi + l:, :n_xi]
        H32 = H[n_xi + l:, n_xi:n_xi + l]
        H33 = H[n_xi + l:, n_xi + l:]
        P = H33
        self.F = H31
        self.B1 = H32
        self.E = 0.5 * (H11 + P + self.Y - self.Y.T)
        self.Lambda = jnp.diag(H22)
        self.D11 = -jnp.tril(H22, k=-1)
        self.C1 = -H21
        # The fused rank-1 recurrence in the kernel requires D11 strictly
        # lower triangular (it is by construction); guard against changes.
        assert bool(jnp.all(jnp.triu(self.D11) == 0.0)), "D11 must be strictly lower triangular"
        # TODO(synk): matrix inverse has no Pallas equivalent; E is fixed after
        # set_model_param so E^{-1} is computed once in plain JAX and folded
        # into the state-update weights (must be recomputed if X/Y change).
        self.E_inv = jnp.linalg.inv(self.E)

        inv_lam = 1.0 / self.Lambda
        C1s = self.C1 * inv_lam[:, None]       # (l, n_xi)
        D12s = self.D12 * inv_lam[:, None]     # (l, n)
        Fp = self.E_inv @ self.F               # (n_xi, n_xi)
        B1p = self.E_inv @ self.B1             # (n_xi, l)
        B2p = self.E_inv @ self.B2             # (n_xi, n)
        # Packed lane layout: [xi_lin (n_xi) | u_lin (m) | v (l)].
        self.Wxi = jnp.concatenate([Fp.T, self.C2.T, C1s.T], axis=1)      # (n_xi, W)
        self.Ww = jnp.concatenate([B2p.T, self.D22.T, D12s.T], axis=1)    # (n,   W)
        weps = jnp.concatenate([B1p.T, self.D21.T], axis=1)               # (l, n_xi+m)
        d11ts = self.D11.T * inv_lam[None, :]                             # (l, l)
        self.Wfused = jnp.concatenate([weps, d11ts], axis=1)              # (l,  W)

    def rollout(self, w_seq, xi0):
        T = w_seq.shape[0]
        w2 = w_seq.reshape(T, self.n).astype(jnp.float32)
        xi2 = xi0.reshape(1, self.n_xi).astype(jnp.float32)
        return _ren_rollout(self.Wxi, self.Ww, self.Wfused, w2, xi2)

    def forward(self, t, w, xi):
        """Single-step interface matching the PyTorch module (T=1 rollout)."""
        del t  # unused, kept for interface fidelity
        u_seq, xi_seq = self.rollout(w.reshape(1, self.n), xi)
        return u_seq[0], xi_seq[0]


def ren_step_ref(model, w, xi):
    """Pure-JAX reference mirroring the PyTorch forward loop."""
    l = model.l
    eps = jnp.zeros((l,), jnp.float32)
    v = model.C1[0, :] @ xi + model.D12[0, :] @ w
    eps = eps.at[0].set(jnp.tanh(v / model.Lambda[0]))
    for i in range(1, l):
        v = model.C1[i, :] @ xi + model.D11[i, :] @ eps + model.D12[i, :] @ w
        eps = eps.at[i].set(jnp.tanh(v / model.Lambda[i]))
    e_xi = model.F @ xi + model.B1 @ eps + model.B2 @ w
    xi_new = model.E_inv @ e_xi
    u = model.C2 @ xi + model.D21 @ eps + model.D22 @ w
    return u, xi_new


if __name__ == "__main__":
    n, m, n_xi, l = 4, 3, 8, 6
    T = 8
    key = jax.random.PRNGKey(0)
    k_model, k_w, k_xi = jax.random.split(key, 3)

    model = RENPallas(n, m, n_xi, l, k_model)
    w_seq = jax.random.normal(k_w, (T, n), jnp.float32)
    xi0 = jax.random.normal(k_xi, (n_xi,), jnp.float32)

    # T-step rollout in a single kernel invocation.
    u_seq, xi_seq = model.rollout(w_seq, xi0)
    jax.block_until_ready((u_seq, xi_seq))

    # Pure-JAX reference rollout (mirrors the PyTorch per-step semantics).
    xi = xi0
    u_refs, xi_refs = [], []
    for t in range(T):
        u_t, xi = ren_step_ref(model, w_seq[t], xi)
        u_refs.append(u_t)
        xi_refs.append(xi)
    u_ref = jnp.stack(u_refs)
    xi_ref = jnp.stack(xi_refs)

    assert jnp.allclose(u_seq, u_ref, atol=1e-3, rtol=1e-2), (u_seq, u_ref)
    assert jnp.allclose(xi_seq, xi_ref, atol=1e-3, rtol=1e-2), (xi_seq, xi_ref)

    # Single-step interface check (same semantics as the PyTorch forward).
    u0, xi1 = model.forward(0, w_seq[0], xi0)
    jax.block_until_ready((u0, xi1))
    assert jnp.allclose(u0, u_ref[0], atol=1e-3, rtol=1e-2)
    assert jnp.allclose(xi1, xi_ref[0], atol=1e-3, rtol=1e-2)

    print("KERNEL_OK")
</pallas_src>

<mosaic_0001>
module attributes {stable_mosaic.version = 11 : i64} {
  func.func @ren_rollout_kernel(%arg0: i32, %arg1: memref<8x17xf32, #tpu.memory_space<vmem>>, %arg2: memref<6x17xf32, #tpu.memory_space<vmem>>, %arg3: memref<1x8xf32, #tpu.memory_space<vmem>>, %arg4: memref<8x17xf32, #tpu.memory_space<vmem>>, %arg5: memref<8x11xf32, #tpu.memory_space<vmem>>, %arg6: memref<1x8xf32, #tpu.memory_space<vmem>>) attributes {dimension_semantics = [#tpu.dimension_semantics<arbitrary>], iteration_bounds = array<i64: 1>, scalar_prefetch = 0 : i64, scratch_operands = 1 : i64, tpu.core_type = #tpu.core_type<tc>, window_params = [{pipeline_mode = #tpu.pipeline_mode<synchronous>, transform_indices = @transform_0, window_bounds = array<i64: 8, 17>}, {pipeline_mode = #tpu.pipeline_mode<synchronous>, transform_indices = @transform_1, window_bounds = array<i64: 6, 17>}, {pipeline_mode = #tpu.pipeline_mode<synchronous>, transform_indices = @transform_2, window_bounds = array<i64: 1, 8>}, {transform_indices = @transform_3, window_bounds = array<i64: 8, 17>}, {transform_indices = @transform_4, window_bounds = array<i64: 8, 11>}]} {
    %c0_i32 = arith.constant 0 : i32
    %0 = arith.cmpi eq, %arg0, %c0_i32 : i32
    %1 = arith.extui %0 : i1 to i32
    %c0_i32_0 = arith.constant 0 : i32
    %2 = arith.cmpi ne, %1, %c0_i32_0 : i32
    scf.if %2 {
      %c0_11 = arith.constant 0 : index
      %c0_12 = arith.constant 0 : index
      %646 = vector.load %arg3[%c0_11, %c0_12] : memref<1x8xf32, #tpu.memory_space<vmem>>, vector<1x8xf32>
      %c0_13 = arith.constant 0 : index
      %c0_14 = arith.constant 0 : index
      %647 = vector.load %arg6[%c0_13, %c0_14] : memref<1x8xf32, #tpu.memory_space<vmem>>, vector<1x8xf32>
      tpu.vector_store %arg6[%c0_13, %c0_14], %646 {strides = array<i32>} : memref<1x8xf32, #tpu.memory_space<vmem>>, vector<1x8xf32>,
    } else {
    }
    %c0 = arith.constant 0 : index
    %c0_1 = arith.constant 0 : index
    %3 = vector.load %arg1[%c0, %c0_1] : memref<8x17xf32, #tpu.memory_space<vmem>>, vector<8x17xf32>
    %c0_2 = arith.constant 0 : index
    %c0_3 = arith.constant 0 : index
    %4 = vector.load %arg2[%c0_2, %c0_3] : memref<6x17xf32, #tpu.memory_space<vmem>>, vector<6x17xf32>
    %c0_4 = arith.constant 0 : index
    %c0_5 = arith.constant 0 : index
    %5 = vector.load %arg6[%c0_4, %c0_5] : memref<1x8xf32, #tpu.memory_space<vmem>>, vector<1x8xf32>
    %c0_i32_6 = arith.constant 0 : i32
    %c8_i32 = arith.constant 8 : i32
    %6 = arith.muli %c0_i32_6, %c8_i32 : i32
    %7 = tpu.assume_multiple %6, 8 : i32
    %8 = arith.index_cast %7 : i32 to index
    %c0_7 = arith.constant 0 : index
    %9 = vector.load %arg4[%8, %c0_7] : memref<8x17xf32, #tpu.memory_space<vmem>>, vector<8x17xf32>
    %10 = vector.extract_strided_slice %9 {offsets = [0, 0], sizes = [1, 17], strides = [1, 1]} : vector<8x17xf32> to vector<1x17xf32>
    %11 = vector.extract_strided_slice %5 {offsets = [0, 0], sizes = [1, 1], strides = [1, 1]} : vector<1x8xf32> to vector<1x1xf32>
    %12 = vector.extract_strided_slice %3 {offsets = [0, 0], sizes = [1, 17], strides = [1, 1]} : vector<8x17xf32> to vector<1x17xf32>
    %13 = vector.broadcast %11 : vector<1x1xf32> to vector<1x17xf32>
    %14 = arith.mulf %13, %12 : vector<1x17xf32>
    %15 = vector.extract_strided_slice %5 {offsets = [0, 1], sizes = [1, 1], strides = [1, 1]} : vector<1x8xf32> to vector<1x1xf32>
    %16 = vector.extract_strided_slice %3 {offsets = [1, 0], sizes = [1, 17], strides = [1, 1]} : vector<8x17xf32> to vector<1x17xf32>
    %17 = vector.broadcast %15 : vector<1x1xf32> to vector<1x17xf32>
    %18 = arith.mulf %17, %16 : vector<1x17xf32>
    %19 = vector.extract_strided_slice %5 {offsets = [0, 2], sizes = [1, 1], strides = [1, 1]} : vector<1x8xf32> to vector<1x1xf32>
    %20 = vector.extract_strided_slice %3 {offsets = [2, 0], sizes = [1, 17], strides = [1, 1]} : vector<8x17xf32> to vector<1x17xf32>
    %21 = vector.broadcast %19 : vector<1x1xf32> to vector<1x17xf32>
    %22 = arith.mulf %21, %20 : vector<1x17xf32>
    %23 = vector.extract_strided_slice %5 {offsets = [0, 3], sizes = [1, 1], strides = [1, 1]} : vector<1x8xf32> to vector<1x1xf32>
    %24 = vector.extract_strided_slice %3 {offsets = [3, 0], sizes = [1, 17], strides = [1, 1]} : vector<8x17xf32> to vector<1x17xf32>
    %25 = vector.broadcast %23 : vector<1x1xf32> to vector<1x17xf32>
    %26 = arith.mulf %25, %24 : vector<1x17xf32>
    %27 = vector.extract_strided_slice %5 {offsets = [0, 4], sizes = [1, 1], strides = [1, 1]} : vector<1x8xf32> to vector<1x1xf32>
    %28 = vector.extract_strided_slice %3 {offsets = [4, 0], sizes = [1, 17], strides = [1, 1]} : vector<8x17xf32> to vector<1x17xf32>
    %29 = vector.broadcast %27 : vector<1x1xf32> to vector<1x17xf32>
    %30 = arith.mulf %29, %28 : vector<1x17xf32>
    %31 = vector.extract_strided_slice %5 {offsets = [0, 5], sizes = [1, 1], strides = [1, 1]} : vector<1x8xf32> to vector<1x1xf32>
    %32 = vector.extract_strided_slice %3 {offsets = [5, 0], sizes = [1, 17], strides = [1, 1]} : vector<8x17xf32> to vector<1x17xf32>
    %33 = vector.broadcast %31 : vector<1x1xf32> to vector<1x17xf32>
    %34 = arith.mulf %33, %32 : vector<1x17xf32>
    %35 = vector.extract_strided_slice %5 {offsets = [0, 6], sizes = [1, 1], strides = [1, 1]} : vector<1x8xf32> to vector<1x1xf32>
    %36 = vector.extract_strided_slice %3 {offsets = [6, 0], sizes = [1, 17], strides = [1, 1]} : vector<8x17xf32> to vector<1x17xf32>
    %37 = vector.broadcast %35 : vector<1x1xf32> to vector<1x17xf32>
    %38 = arith.mulf %37, %36 : vector<1x17xf32>
    %39 = vector.extract_strided_slice %5 {offsets = [0, 7], sizes = [1, 1], strides = [1, 1]} : vector<1x8xf32> to vector<1x1xf32>
    %40 = vector.extract_strided_slice %3 {offsets = [7, 0], sizes = [1, 17], strides = [1, 1]} : vector<8x17xf32> to vector<1x17xf32>
    %41 = vector.broadcast %39 : vector<1x1xf32> to vector<1x17xf32>
    %42 = arith.mulf %41, %40 : vector<1x17xf32>
    %43 = arith.addf %14, %18 : vector<1x17xf32>
    %44 = arith.addf %22, %26 : vector<1x17xf32>
    %45 = arith.addf %30, %34 : vector<1x17xf32>
    %46 = arith.addf %38, %42 : vector<1x17xf32>
    %47 = arith.addf %43, %44 : vector<1x17xf32>
    %48 = arith.addf %45, %46 : vector<1x17xf32>
    %49 = arith.addf %47, %48 : vector<1x17xf32>
    %50 = arith.addf %10, %49 : vector<1x17xf32>
    %51 = vector.extract_strided_slice %50 {offsets = [0, 11], sizes = [1, 1], strides = [1, 1]} : vector<1x17xf32> to vector<1x1xf32>
    %52 = math.tanh %51 : vector<1x1xf32>
    %53 = vector.extract_strided_slice %4 {offsets = [0, 0], sizes = [1, 17], strides = [1, 1]} : vector<6x17xf32> to vector<1x17xf32>
    %54 = vector.broadcast %52 : vector<1x1xf32> to vector<1x17xf32>
    %55 = arith.mulf %54, %53 : vector<1x17xf32>
    %56 = arith.addf %50, %55 : vector<1x17xf32>
    %57 = vector.extract_strided_slice %56 {offsets = [0, 12], sizes = [1, 1], strides = [1, 1]} : vector<1x17xf32> to vector<1x1xf32>
    %58 = math.tanh %57 : vector<1x1xf32>
    %59 = vector.extract_strided_slice %4 {offsets = [1, 0], sizes = [1, 17], strides = [1, 1]} : vector<6x17xf32> to vector<1x17xf32>
    %60 = vector.broadcast %58 : vector<1x1xf32> to vector<1x17xf32>
    %61 = arith.mulf %60, %59 : vector<1x17xf32>
    %62 = arith.addf %56, %61 : vector<1x17xf32>
    %63 = vector.extract_strided_slice %62 {offsets = [0, 13], sizes = [1, 1], strides = [1, 1]} : vector<1x17xf32> to vector<1x1xf32>
    %64 = math.tanh %63 : vector<1x1xf32>
    %65 = vector.extract_strided_slice %4 {offsets = [2, 0], sizes = [1, 17], strides = [1, 1]} : vector<6x17xf32> to vector<1x17xf32>
    %66 = vector.broadcast %64 : vector<1x1xf32> to vector<1x17xf32>
    %67 = arith.mulf %66, %65 : vector<1x17xf32>
    %68 = arith.addf %62, %67 : vector<1x17xf32>
    %69 = vector.extract_strided_slice %68 {offsets = [0, 14], sizes = [1, 1], strides = [1, 1]} : vector<1x17xf32> to vector<1x1xf32>
    %70 = math.tanh %69 : vector<1x1xf32>
    %71 = vector.extract_strided_slice %4 {offsets = [3, 0], sizes = [1, 17], strides = [1, 1]} : vector<6x17xf32> to vector<1x17xf32>
    %72 = vector.broadcast %70 : vector<1x1xf32> to vector<1x17xf32>
    %73 = arith.mulf %72, %71 : vector<1x17xf32>
    %74 = arith.addf %68, %73 : vector<1x17xf32>
    %75 = vector.extract_strided_slice %74 {offsets = [0, 15], sizes = [1, 1], strides = [1, 1]} : vector<1x17xf32> to vector<1x1xf32>
    %76 = math.tanh %75 : vector<1x1xf32>
    %77 = vector.extract_strided_slice %4 {offsets = [4, 0], sizes = [1, 17], strides = [1, 1]} : vector<6x17xf32> to vector<1x17xf32>
    %78 = vector.broadcast %76 : vector<1x1xf32> to vector<1x17xf32>
    %79 = arith.mulf %78, %77 : vector<1x17xf32>
    %80 = arith.addf %74, %79 : vector<1x17xf32>
    %81 = vector.extract_strided_slice %80 {offsets = [0, 16], sizes = [1, 1], strides = [1, 1]} : vector<1x17xf32> to vector<1x1xf32>
    %82 = math.tanh %81 : vector<1x1xf32>
    %83 = vector.extract_strided_slice %4 {offsets = [5, 0], sizes = [1, 17], strides = [1, 1]} : vector<6x17xf32> to vector<1x17xf32>
    %84 = vector.broadcast %82 : vector<1x1xf32> to vector<1x17xf32>
    %85 = arith.mulf %84, %83 : vector<1x17xf32>
    %86 = arith.addf %80, %85 : vector<1x17xf32>
    %87 = vector.extract_strided_slice %86 {offsets = [0, 0], sizes = [1, 11], strides = [1, 1]} : vector<1x17xf32> to vector<1x11xf32>
    %88 = vector.extract_strided_slice %86 {offsets = [0, 0], sizes = [1, 8], strides = [1, 1]} : vector<1x17xf32> to vector<1x8xf32>
    %89 = vector.extract_strided_slice %9 {offsets = [1, 0], sizes = [1, 17], strides = [1, 1]} : vector<8x17xf32> to vector<1x17xf32>
    %90 = vector.extract_strided_slice %88 {offsets = [0, 0], sizes = [1, 1], strides = [1, 1]} : vector<1x8xf32> to vector<1x1xf32>
    %91 = vector.extract_strided_slice %3 {offsets = [0, 0], sizes = [1, 17], strides = [1, 1]} : vector<8x17xf32> to vector<1x17xf32>
    %92 = vector.broadcast %90 : vector<1x1xf32> to vector<1x17xf32>
    %93 = arith.mulf %92, %91 : vector<1x17xf32>
    %94 = vector.extract_strided_slice %88 {offsets = [0, 1], sizes = [1, 1], strides = [1, 1]} : vector<1x8xf32> to vector<1x1xf32>
    %95 = vector.extract_strided_slice %3 {offsets = [1, 0], sizes = [1, 17], strides = [1, 1]} : vector<8x17xf32> to vector<1x17xf32>
    %96 = vector.broadcast %94 : vector<1x1xf32> to vector<1x17xf32>
    %97 = arith.mulf %96, %95 : vector<1x17xf32>
    %98 = vector.extract_strided_slice %88 {offsets = [0, 2], sizes = [1, 1], strides = [1, 1]} : vector<1x8xf32> to vector<1x1xf32>
    %99 = vector.extract_strided_slice %3 {offsets = [2, 0], sizes = [1, 17], strides = [1, 1]} : vector<8x17xf32> to vector<1x17xf32>
    %100 = vector.broadcast %98 : vector<1x1xf32> to vector<1x17xf32>
    %101 = arith.mulf %100, %99 : vector<1x17xf32>
    %102 = vector.extract_strided_slice %88 {offsets = [0, 3], sizes = [1, 1], strides = [1, 1]} : vector<1x8xf32> to vector<1x1xf32>
    %103 = vector.extract_strided_slice %3 {offsets = [3, 0], sizes = [1, 17], strides = [1, 1]} : vector<8x17xf32> to vector<1x17xf32>
    %104 = vector.broadcast %102 : vector<1x1xf32> to vector<1x17xf32>
    %105 = arith.mulf %104, %103 : vector<1x17xf32>
    %106 = vector.extract_strided_slice %88 {offsets = [0, 4], sizes = [1, 1], strides = [1, 1]} : vector<1x8xf32> to vector<1x1xf32>
    %107 = vector.extract_strided_slice %3 {offsets = [4, 0], sizes = [1, 17], strides = [1, 1]} : vector<8x17xf32> to vector<1x17xf32>
    %108 = vector.broadcast %106 : vector<1x1xf32> to vector<1x17xf32>
    %109 = arith.mulf %108, %107 : vector<1x17xf32>
    %110 = vector.extract_strided_slice %88 {offsets = [0, 5], sizes = [1, 1], strides = [1, 1]} : vector<1x8xf32> to vector<1x1xf32>
    %111 = vector.extract_strided_slice %3 {offsets = [5, 0], sizes = [1, 17], strides = [1, 1]} : vector<8x17xf32> to vector<1x17xf32>
    %112 = vector.broadcast %110 : vector<1x1xf32> to vector<1x17xf32>
    %113 = arith.mulf %112, %111 : vector<1x17xf32>
    %114 = vector.extract_strided_slice %88 {offsets = [0, 6], sizes = [1, 1], strides = [1, 1]} : vector<1x8xf32> to vector<1x1xf32>
    %115 = vector.extract_strided_slice %3 {offsets = [6, 0], sizes = [1, 17], strides = [1, 1]} : vector<8x17xf32> to vector<1x17xf32>
    %116 = vector.broadcast %114 : vector<1x1xf32> to vector<1x17xf32>
    %117 = arith.mulf %116, %115 : vector<1x17xf32>
    %118 = vector.extract_strided_slice %88 {offsets = [0, 7], sizes = [1, 1], strides = [1, 1]} : vector<1x8xf32> to vector<1x1xf32>
    %119 = vector.extract_strided_slice %3 {offsets = [7, 0], sizes = [1, 17], strides = [1, 1]} : vector<8x17xf32> to vector<1x17xf32>
    %120 = vector.broadcast %118 : vector<1x1xf32> to vector<1x17xf32>
    %121 = arith.mulf %120, %119 : vector<1x17xf32>
    %122 = arith.addf %93, %97 : vector<1x17xf32>
    %123 = arith.addf %101, %105 : vector<1x17xf32>
    %124 = arith.addf %109, %113 : vector<1x17xf32>
    %125 = arith.addf %117, %121 : vector<1x17xf32>
    %126 = arith.addf %122, %123 : vector<1x17xf32>
    %127 = arith.addf %124, %125 : vector<1x17xf32>
    %128 = arith.addf %126, %127 : vector<1x17xf32>
    %129 = arith.addf %89, %128 : vector<1x17xf32>
    %130 = vector.extract_strided_slice %129 {offsets = [0, 11], sizes = [1, 1], strides = [1, 1]} : vector<1x17xf32> to vector<1x1xf32>
    %131 = math.tanh %130 : vector<1x1xf32>
    %132 = vector.extract_strided_slice %4 {offsets = [0, 0], sizes = [1, 17], strides = [1, 1]} : vector<6x17xf32> to vector<1x17xf32>
    %133 = vector.broadcast %131 : vector<1x1xf32> to vector<1x17xf32>
    %134 = arith.mulf %133, %132 : vector<1x17xf32>
    %135 = arith.addf %129, %134 : vector<1x17xf32>
    %136 = vector.extract_strided_slice %135 {offsets = [0, 12], sizes = [1, 1], strides = [1, 1]} : vector<1x17xf32> to vector<1x1xf32>
    %137 = math.tanh %136 : vector<1x1xf32>
    %138 = vector.extract_strided_slice %4 {offsets = [1, 0], sizes = [1, 17], strides = [1, 1]} : vector<6x17xf32> to vector<1x17xf32>
    %139 = vector.broadcast %137 : vector<1x1xf32> to vector<1x17xf32>
    %140 = arith.mulf %139, %138 : vector<1x17xf32>
    %141 = arith.addf %135, %140 : vector<1x17xf32>
    %142 = vector.extract_strided_slice %141 {offsets = [0, 13], sizes = [1, 1], strides = [1, 1]} : vector<1x17xf32> to vector<1x1xf32>
    %143 = math.tanh %142 : vector<1x1xf32>
    %144 = vector.extract_strided_slice %4 {offsets = [2, 0], sizes = [1, 17], strides = [1, 1]} : vector<6x17xf32> to vector<1x17xf32>
    %145 = vector.broadcast %143 : vector<1x1xf32> to vector<1x17xf32>
    %146 = arith.mulf %145, %144 : vector<1x17xf32>
    %147 = arith.addf %141, %146 : vector<1x17xf32>
    %148 = vector.extract_strided_slice %147 {offsets = [0, 14], sizes = [1, 1], strides = [1, 1]} : vector<1x17xf32> to vector<1x1xf32>
    %149 = math.tanh %148 : vector<1x1xf32>
    %150 = vector.extract_strided_slice %4 {offsets = [3, 0], sizes = [1, 17], strides = [1, 1]} : vector<6x17xf32> to vector<1x17xf32>
    %151 = vector.broadcast %149 : vector<1x1xf32> to vector<1x17xf32>
    %152 = arith.mulf %151, %150 : vector<1x17xf32>
    %153 = arith.addf %147, %152 : vector<1x17xf32>
    %154 = vector.extract_strided_slice %153 {offsets = [0, 15], sizes = [1, 1], strides = [1, 1]} : vector<1x17xf32> to vector<1x1xf32>
    %155 = math.tanh %154 : vector<1x1xf32>
    %156 = vector.extract_strided_slice %4 {offsets = [4, 0], sizes = [1, 17], strides = [1, 1]} : vector<6x17xf32> to vector<1x17xf32>
    %157 = vector.broadcast %155 : vector<1x1xf32> to vector<1x17xf32>
    %158 = arith.mulf %157, %156 : vector<1x17xf32>
    %159 = arith.addf %153, %158 : vector<1x17xf32>
    %160 = vector.extract_strided_slice %159 {offsets = [0, 16], sizes = [1, 1], strides = [1, 1]} : vector<1x17xf32> to vector<1x1xf32>
    %161 = math.tanh %160 : vector<1x1xf32>
    %162 = vector.extract_strided_slice %4 {offsets = [5, 0], sizes = [1, 17], strides = [1, 1]} : vector<6x17xf32> to vector<1x17xf32>
    %163 = vector.broadcast %161 : vector<1x1xf32> to vector<1x17xf32>
    %164 = arith.mulf %163, %162 : vector<1x17xf32>
    %165 = arith.addf %159, %164 : vector<1x17xf32>
    %166 = vector.extract_strided_slice %165 {offsets = [0, 0], sizes = [1, 11], strides = [1, 1]} : vector<1x17xf32> to vector<1x11xf32>
    %167 = vector.extract_strided_slice %165 {offsets = [0, 0], sizes = [1, 8], strides = [1, 1]} : vector<1x17xf32> to vector<1x8xf32>
    %168 = vector.extract_strided_slice %9 {offsets = [2, 0], sizes = [1, 17], strides = [1, 1]} : vector<8x17xf32> to vector<1x17xf32>
    %169 = vector.extract_strided_slice %167 {offsets = [0, 0], sizes = [1, 1], strides = [1, 1]} : vector<1x8xf32> to vector<1x1xf32>
    %170 = vector.extract_strided_slice %3 {offsets = [0, 0], sizes = [1, 17], strides = [1, 1]} : vector<8x17xf32> to vector<1x17xf32>
    %171 = vector.broadcast %169 : vector<1x1xf32> to vector<1x17xf32>
    %172 = arith.mulf %171, %170 : vector<1x17xf32>
    %173 = vector.extract_strided_slice %167 {offsets = [0, 1], sizes = [1, 1], strides = [1, 1]} : vector<1x8xf32> to vector<1x1xf32>
    %174 = vector.extract_strided_slice %3 {offsets = [1, 0], sizes = [1, 17], strides = [1, 1]} : vector<8x17xf32> to vector<1x17xf32>
    %175 = vector.broadcast %173 : vector<1x1xf32> to vector<1x17xf32>
    %176 = arith.mulf %175, %174 : vector<1x17xf32>
    %177 = vector.extract_strided_slice %167 {offsets = [0, 2], sizes = [1, 1], strides = [1, 1]} : vector<1x8xf32> to vector<1x1xf32>
    %178 = vector.extract_strided_slice %3 {offsets = [2, 0], sizes = [1, 17], strides = [1, 1]} : vector<8x17xf32> to vector<1x17xf32>
    %179 = vector.broadcast %177 : vector<1x1xf32> to vector<1x17xf32>
    %180 = arith.mulf %179, %178 : vector<1x17xf32>
    %181 = vector.extract_strided_slice %167 {offsets = [0, 3], sizes = [1, 1], strides = [1, 1]} : vector<1x8xf32> to vector<1x1xf32>
    %182 = vector.extract_strided_slice %3 {offsets = [3, 0], sizes = [1, 17], strides = [1, 1]} : vector<8x17xf32> to vector<1x17xf32>
    %183 = vector.broadcast %181 : vector<1x1xf32> to vector<1x17xf32>
    %184 = arith.mulf %183, %182 : vector<1x17xf32>
    %185 = vector.extract_strided_slice %167 {offsets = [0, 4], sizes = [1, 1], strides = [1, 1]} : vector<1x8xf32> to vector<1x1xf32>
    %186 = vector.extract_strided_slice %3 {offsets = [4, 0], sizes = [1, 17], strides = [1, 1]} : vector<8x17xf32> to vector<1x17xf32>
    %187 = vector.broadcast %185 : vector<1x1xf32> to vector<1x17xf32>
    %188 = arith.mulf %187, %186 : vector<1x17xf32>
    %189 = vector.extract_strided_slice %167 {offsets = [0, 5], sizes = [1, 1], strides = [1, 1]} : vector<1x8xf32> to vector<1x1xf32>
    %190 = vector.extract_strided_slice %3 {offsets = [5, 0], sizes = [1, 17], strides = [1, 1]} : vector<8x17xf32> to vector<1x17xf32>
    %191 = vector.broadcast %189 : vector<1x1xf32> to vector<1x17xf32>
    %192 = arith.mulf %191, %190 : vector<1x17xf32>
    %193 = vector.extract_strided_slice %167 {offsets = [0, 6], sizes = [1, 1], strides = [1, 1]} : vector<1x8xf32> to vector<1x1xf32>
    %194 = vector.extract_strided_slice %3 {offsets = [6, 0], sizes = [1, 17], strides = [1, 1]} : vector<8x17xf32> to vector<1x17xf32>
    %195 = vector.broadcast %193 : vector<1x1xf32> to vector<1x17xf32>
    %196 = arith.mulf %195, %194 : vector<1x17xf32>
    %197 = vector.extract_strided_slice %167 {offsets = [0, 7], sizes = [1, 1], strides = [1, 1]} : vector<1x8xf32> to vector<1x1xf32>
    %198 = vector.extract_strided_slice %3 {offsets = [7, 0], sizes = [1, 17], strides = [1, 1]} : vector<8x17xf32> to vector<1x17xf32>
    %199 = vector.broadcast %197 : vector<1x1xf32> to vector<1x17xf32>
    %200 = arith.mulf %199, %198 : vector<1x17xf32>
    %201 = arith.addf %172, %176 : vector<1x17xf32>
    %202 = arith.addf %180, %184 : vector<1x17xf32>
    %203 = arith.addf %188, %192 : vector<1x17xf32>
    %204 = arith.addf %196, %200 : vector<1x17xf32>
    %205 = arith.addf %201, %202 : vector<1x17xf32>
    %206 = arith.addf %203, %204 : vector<1x17xf32>
    %207 = arith.addf %205, %206 : vector<1x17xf32>
    %208 = arith.addf %168, %207 : vector<1x17xf32>
    %209 = vector.extract_strided_slice %208 {offsets = [0, 11], sizes = [1, 1], strides = [1, 1]} : vector<1x17xf32> to vector<1x1xf32>
    %210 = math.tanh %209 : vector<1x1xf32>
    %211 = vector.extract_strided_slice %4 {offsets = [0, 0], sizes = [1, 17], strides = [1, 1]} : vector<6x17xf32> to vector<1x17xf32>
    %212 = vector.broadcast %210 : vector<1x1xf32> to vector<1x17xf32>
    %213 = arith.mulf %212, %211 : vector<1x17xf32>
    %214 = arith.addf %208, %213 : vector<1x17xf32>
    %215 = vector.extract_strided_slice %214 {offsets = [0, 12], sizes = [1, 1], strides = [1, 1]} : vector<1x17xf32> to vector<1x1xf32>
    %216 = math.tanh %215 : vector<1x1xf32>
    %217 = vector.extract_strided_slice %4 {offsets = [1, 0], sizes = [1, 17], strides = [1, 1]} : vector<6x17xf32> to vector<1x17xf32>
    %218 = vector.broadcast %216 : vector<1x1xf32> to vector<1x17xf32>
    %219 = arith.mulf %218, %217 : vector<1x17xf32>
    %220 = arith.addf %214, %219 : vector<1x17xf32>
    %221 = vector.extract_strided_slice %220 {offsets = [0, 13], sizes = [1, 1], strides = [1, 1]} : vector<1x17xf32> to vector<1x1xf32>
    %222 = math.tanh %221 : vector<1x1xf32>
    %223 = vector.extract_strided_slice %4 {offsets = [2, 0], sizes = [1, 17], strides = [1, 1]} : vector<6x17xf32> to vector<1x17xf32>
    %224 = vector.broadcast %222 : vector<1x1xf32> to vector<1x17xf32>
    %225 = arith.mulf %224, %223 : vector<1x17xf32>
    %226 = arith.addf %220, %225 : vector<1x17xf32>
    %227 = vector.extract_strided_slice %226 {offsets = [0, 14], sizes = [1, 1], strides = [1, 1]} : vector<1x17xf32> to vector<1x1xf32>
    %228 = math.tanh %227 : vector<1x1xf32>
    %229 = vector.extract_strided_slice %4 {offsets = [3, 0], sizes = [1, 17], strides = [1, 1]} : vector<6x17xf32> to vector<1x17xf32>
    %230 = vector.broadcast %228 : vector<1x1xf32> to vector<1x17xf32>
    %231 = arith.mulf %230, %229 : vector<1x17xf32>
    %232 = arith.addf %226, %231 : vector<1x17xf32>
    %233 = vector.extract_strided_slice %232 {offsets = [0, 15], sizes = [1, 1], strides = [1, 1]} : vector<1x17xf32> to vector<1x1xf32>
    %234 = math.tanh %233 : vector<1x1xf32>
    %235 = vector.extract_strided_slice %4 {offsets = [4, 0], sizes = [1, 17], strides = [1, 1]} : vector<6x17xf32> to vector<1x17xf32>
    %236 = vector.broadcast %234 : vector<1x1xf32> to vector<1x17xf32>
    %237 = arith.mulf %236, %235 : vector<1x17xf32>
    %238 = arith.addf %232, %237 : vector<1x17xf32>
    %239 = vector.extract_strided_slice %238 {offsets = [0, 16], sizes = [1, 1], strides = [1, 1]} : vector<1x17xf32> to vector<1x1xf32>
    %240 = math.tanh %239 : vector<1x1xf32>
    %241 = vector.extract_strided_slice %4 {offsets = [5, 0], sizes = [1, 17], strides = [1, 1]} : vector<6x17xf32> to vector<1x17xf32>
    %242 = vector.broadcast %240 : vector<1x1xf32> to vector<1x17xf32>
    %243 = arith.mulf %242, %241 : vector<1x17xf32>
    %244 = arith.addf %238, %243 : vector<1x17xf32>
    %245 = vector.extract_strided_slice %244 {offsets = [0, 0], sizes = [1, 11], strides = [1, 1]} : vector<1x17xf32> to vector<1x11xf32>
    %246 = vector.extract_strided_slice %244 {offsets = [0, 0], sizes = [1, 8], strides = [1, 1]} : vector<1x17xf32> to vector<1x8xf32>
    %247 = vector.extract_strided_slice %9 {offsets = [3, 0], sizes = [1, 17], strides = [1, 1]} : vector<8x17xf32> to vector<1x17xf32>
    %248 = vector.extract_strided_slice %246 {offsets = [0, 0], sizes = [1, 1], strides = [1, 1]} : vector<1x8xf32> to vector<1x1xf32>
    %249 = vector.extract_strided_slice %3 {offsets = [0, 0], sizes = [1, 17], strides = [1, 1]} : vector<8x17xf32> to vector<1x17xf32>
    %250 = vector.broadcast %248 : vector<1x1xf32> to vector<1x17xf32>
    %251 = arith.mulf %250, %249 : vector<1x17xf32>
    %252 = vector.extract_strided_slice %246 {offsets = [0, 1], sizes = [1, 1], strides = [1, 1]} : vector<1x8xf32> to vector<1x1xf32>
    %253 = vector.extract_strided_slice %3 {offsets = [1, 0], sizes = [1, 17], strides = [1, 1]} : vector<8x17xf32> to vector<1x17xf32>
    %254 = vector.broadcast %252 : vector<1x1xf32> to vector<1x17xf32>
    %255 = arith.mulf %254, %253 : vector<1x17xf32>
    %256 = vector.extract_strided_slice %246 {offsets = [0, 2], sizes = [1, 1], strides = [1, 1]} : vector<1x8xf32> to vector<1x1xf32>
    %257 = vector.extract_strided_slice %3 {offsets = [2, 0], sizes = [1, 17], strides = [1, 1]} : vector<8x17xf32> to vector<1x17xf32>
    %258 = vector.broadcast %256 : vector<1x1xf32> to vector<1x17xf32>
    %259 = arith.mulf %258, %257 : vector<1x17xf32>
    %260 = vector.extract_strided_slice %246 {offsets = [0, 3], sizes = [1, 1], strides = [1, 1]} : vector<1x8xf32> to vector<1x1xf32>
    %261 = vector.extract_strided_slice %3 {offsets = [3, 0], sizes = [1, 17], strides = [1, 1]} : vector<8x17xf32> to vector<1x17xf32>
    %262 = vector.broadcast %260 : vector<1x1xf32> to vector<1x17xf32>
    %263 = arith.mulf %262, %261 : vector<1x17xf32>
    %264 = vector.extract_strided_slice %246 {offsets = [0, 4], sizes = [1, 1], strides = [1, 1]} : vector<1x8xf32> to vector<1x1xf32>
    %265 = vector.extract_strided_slice %3 {offsets = [4, 0], sizes = [1, 17], strides = [1, 1]} : vector<8x17xf32> to vector<1x17xf32>
    %266 = vector.broadcast %264 : vector<1x1xf32> to vector<1x17xf32>
    %267 = arith.mulf %266, %265 : vector<1x17xf32>
    %268 = vector.extract_strided_slice %246 {offsets = [0, 5], sizes = [1, 1], strides = [1, 1]} : vector<1x8xf32> to vector<1x1xf32>
    %269 = vector.extract_strided_slice %3 {offsets = [5, 0], sizes = [1, 17], strides = [1, 1]} : vector<8x17xf32> to vector<1x17xf32>
    %270 = vector.broadcast %268 : vector<1x1xf32> to vector<1x17xf32>
    %271 = arith.mulf %270, %269 : vector<1x17xf32>
    %272 = vector.extract_strided_slice %246 {offsets = [0, 6], sizes = [1, 1], strides = [1, 1]} : vector<1x8xf32> to vector<1x1xf32>
    %273 = vector.extract_strided_slice %3 {offsets = [6, 0], sizes = [1, 17], strides = [1, 1]} : vector<8x17xf32> to vector<1x17xf32>
    %274 = vector.broadcast %272 : vector<1x1xf32> to vector<1x17xf32>
    %275 = arith.mulf %274, %273 : vector<1x17xf32>
    %276 = vector.extract_strided_slice %246 {offsets = [0, 7], sizes = [1, 1], strides = [1, 1]} : vector<1x8xf32> to vector<1x1xf32>
    %277 = vector.extract_strided_slice %3 {offsets = [7, 0], sizes = [1, 17], strides = [1, 1]} : vector<8x17xf32> to vector<1x17xf32>
    %278 = vector.broadcast %276 : vector<1x1xf32> to vector<1x17xf32>
    %279 = arith.mulf %278, %277 : vector<1x17xf32>
    %280 = arith.addf %251, %255 : vector<1x17xf32>
    %281 = arith.addf %259, %263 : vector<1x17xf32>
    %282 = arith.addf %267, %271 : vector<1x17xf32>
    %283 = arith.addf %275, %279 : vector<1x17xf32>
    %284 = arith.addf %280, %281 : vector<1x17xf32>
    %285 = arith.addf %282, %283 : vector<1x17xf32>
    %286 = arith.addf %284, %285 : vector<1x17xf32>
    %287 = arith.addf %247, %286 : vector<1x17xf32>
    %288 = vector.extract_strided_slice %287 {offsets = [0, 11], sizes = [1, 1], strides = [1, 1]} : vector<1x17xf32> to vector<1x1xf32>
    %289 = math.tanh %288 : vector<1x1xf32>
    %290 = vector.extract_strided_slice %4 {offsets = [0, 0], sizes = [1, 17], strides = [1, 1]} : vector<6x17xf32> to vector<1x17xf32>
    %291 = vector.broadcast %289 : vector<1x1xf32> to vector<1x17xf32>
    %292 = arith.mulf %291, %290 : vector<1x17xf32>
    %293 = arith.addf %287, %292 : vector<1x17xf32>
    %294 = vector.extract_strided_slice %293 {offsets = [0, 12], sizes = [1, 1], strides = [1, 1]} : vector<1x17xf32> to vector<1x1xf32>
    %295 = math.tanh %294 : vector<1x1xf32>
    %296 = vector.extract_strided_slice %4 {offsets = [1, 0], sizes = [1, 17], strides = [1, 1]} : vector<6x17xf32> to vector<1x17xf32>
    %297 = vector.broadcast %295 : vector<1x1xf32> to vector<1x17xf32>
    %298 = arith.mulf %297, %296 : vector<1x17xf32>
    %299 = arith.addf %293, %298 : vector<1x17xf32>
    %300 = vector.extract_strided_slice %299 {offsets = [0, 13], sizes = [1, 1], strides = [1, 1]} : vector<1x17xf32> to vector<1x1xf32>
    %301 = math.tanh %300 : vector<1x1xf32>
    %302 = vector.extract_strided_slice %4 {offsets = [2, 0], sizes = [1, 17], strides = [1, 1]} : vector<6x17xf32> to vector<1x17xf32>
    %303 = vector.broadcast %301 : vector<1x1xf32> to vector<1x17xf32>
    %304 = arith.mulf %303, %302 : vector<1x17xf32>
    %305 = arith.addf %299, %304 : vector<1x17xf32>
    %306 = vector.extract_strided_slice %305 {offsets = [0, 14], sizes = [1, 1], strides = [1, 1]} : vector<1x17xf32> to vector<1x1xf32>
    %307 = math.tanh %306 : vector<1x1xf32>
    %308 = vector.extract_strided_slice %4 {offsets = [3, 0], sizes = [1, 17], strides = [1, 1]} : vector<6x17xf32> to vector<1x17xf32>
    %309 = vector.broadcast %307 : vector<1x1xf32> to vector<1x17xf32>
    %310 = arith.mulf %309, %308 : vector<1x17xf32>
    %311 = arith.addf %305, %310 : vector<1x17xf32>
    %312 = vector.extract_strided_slice %311 {offsets = [0, 15], sizes = [1, 1], strides = [1, 1]} : vector<1x17xf32> to vector<1x1xf32>
    %313 = math.tanh %312 : vector<1x1xf32>
    %314 = vector.extract_strided_slice %4 {offsets = [4, 0], sizes = [1, 17], strides = [1, 1]} : vector<6x17xf32> to vector<1x17xf32>
    %315 = vector.broadcast %313 : vector<1x1xf32> to vector<1x17xf32>
    %316 = arith.mulf %315, %314 : vector<1x17xf32>
    %317 = arith.addf %311, %316 : vector<1x17xf32>
    %318 = vector.extract_strided_slice %317 {offsets = [0, 16], sizes = [1, 1], strides = [1, 1]} : vector<1x17xf32> to vector<1x1xf32>
    %319 = math.tanh %318 : vector<1x1xf32>
    %320 = vector.extract_strided_slice %4 {offsets = [5, 0], sizes = [1, 17], strides = [1, 1]} : vector<6x17xf32> to vector<1x17xf32>
    %321 = vector.broadcast %319 : vector<1x1xf32> to vector<1x17xf32>
    %322 = arith.mulf %321, %320 : vector<1x17xf32>
    %323 = arith.addf %317, %322 : vector<1x17xf32>
    %324 = vector.extract_strided_slice %323 {offsets = [0, 0], sizes = [1, 11], strides = [1, 1]} : vector<1x17xf32> to vector<1x11xf32>
    %325 = vector.extract_strided_slice %323 {offsets = [0, 0], sizes = [1, 8], strides = [1, 1]} : vector<1x17xf32> to vector<1x8xf32>
    %326 = vector.extract_strided_slice %9 {offsets = [4, 0], sizes = [1, 17], strides = [1, 1]} : vector<8x17xf32> to vector<1x17xf32>
    %327 = vector.extract_strided_slice %325 {offsets = [0, 0], sizes = [1, 1], strides = [1, 1]} : vector<1x8xf32> to vector<1x1xf32>
    %328 = vector.extract_strided_slice %3 {offsets = [0, 0], sizes = [1, 17], strides = [1, 1]} : vector<8x17xf32> to vector<1x17xf32>
    %329 = vector.broadcast %327 : vector<1x1xf32> to vector<1x17xf32>
    %330 = arith.mulf %329, %328 : vector<1x17xf32>
    %331 = vector.extract_strided_slice %325 {offsets = [0, 1], sizes = [1, 1], strides = [1, 1]} : vector<1x8xf32> to vector<1x1xf32>
    %332 = vector.extract_strided_slice %3 {offsets = [1, 0], sizes = [1, 17], strides = [1, 1]} : vector<8x17xf32> to vector<1x17xf32>
    %333 = vector.broadcast %331 : vector<1x1xf32> to vector<1x17xf32>
    %334 = arith.mulf %333, %332 : vector<1x17xf32>
    %335 = vector.extract_strided_slice %325 {offsets = [0, 2], sizes = [1, 1], strides = [1, 1]} : vector<1x8xf32> to vector<1x1xf32>
    %336 = vector.extract_strided_slice %3 {offsets = [2, 0], sizes = [1, 17], strides = [1, 1]} : vector<8x17xf32> to vector<1x17xf32>
    %337 = vector.broadcast %335 : vector<1x1xf32> to vector<1x17xf32>
    %338 = arith.mulf %337, %336 : vector<1x17xf32>
    %339 = vector.extract_strided_slice %325 {offsets = [0, 3], sizes = [1, 1], strides = [1, 1]} : vector<1x8xf32> to vector<1x1xf32>
    %340 = vector.extract_strided_slice %3 {offsets = [3, 0], sizes = [1, 17], strides = [1, 1]} : vector<8x17xf32> to vector<1x17xf32>
    %341 = vector.broadcast %339 : vector<1x1xf32> to vector<1x17xf32>
    %342 = arith.mulf %341, %340 : vector<1x17xf32>
    %343 = vector.extract_strided_slice %325 {offsets = [0, 4], sizes = [1, 1], strides = [1, 1]} : vector<1x8xf32> to vector<1x1xf32>
    %344 = vector.extract_strided_slice %3 {offsets = [4, 0], sizes = [1, 17], strides = [1, 1]} : vector<8x17xf32> to vector<1x17xf32>
    %345 = vector.broadcast %343 : vector<1x1xf32> to vector<1x17xf32>
    %346 = arith.mulf %345, %344 : vector<1x17xf32>
    %347 = vector.extract_strided_slice %325 {offsets = [0, 5], sizes = [1, 1], strides = [1, 1]} : vector<1x8xf32> to vector<1x1xf32>
    %348 = vector.extract_strided_slice %3 {offsets = [5, 0], sizes = [1, 17], strides = [1, 1]} : vector<8x17xf32> to vector<1x17xf32>
    %349 = vector.broadcast %347 : vector<1x1xf32> to vector<1x17xf32>
    %350 = arith.mulf %349, %348 : vector<1x17xf32>
    %351 = vector.extract_strided_slice %325 {offsets = [0, 6], sizes = [1, 1], strides = [1, 1]} : vector<1x8xf32> to vector<1x1xf32>
    %352 = vector.extract_strided_slice %3 {offsets = [6, 0], sizes = [1, 17], strides = [1, 1]} : vector<8x17xf32> to vector<1x17xf32>
    %353 = vector.broadcast %351 : vector<1x1xf32> to vector<1x17xf32>
    %354 = arith.mulf %353, %352 : vector<1x17xf32>
    %355 = vector.extract_strided_slice %325 {offsets = [0, 7], sizes = [1, 1], strides = [1, 1]} : vector<1x8xf32> to vector<1x1xf32>
    %356 = vector.extract_strided_slice %3 {offsets = [7, 0], sizes = [1, 17], strides = [1, 1]} : vector<8x17xf32> to vector<1x17xf32>
    %357 = vector.broadcast %355 : vector<1x1xf32> to vector<1x17xf32>
    %358 = arith.mulf %357, %356 : vector<1x17xf32>
    %359 = arith.addf %330, %334 : vector<1x17xf32>
    %360 = arith.addf %338, %342 : vector<1x17xf32>
    %361 = arith.addf %346, %350 : vector<1x17xf32>
    %362 = arith.addf %354, %358 : vector<1x17xf32>
    %363 = arith.addf %359, %360 : vector<1x17xf32>
    %364 = arith.addf %361, %362 : vector<1x17xf32>
    %365 = arith.addf %363, %364 : vector<1x17xf32>
    %366 = arith.addf %326, %365 : vector<1x17xf32>
    %367 = vector.extract_strided_slice %366 {offsets = [0, 11], sizes = [1, 1], strides = [1, 1]} : vector<1x17xf32> to vector<1x1xf32>
    %368 = math.tanh %367 : vector<1x1xf32>
    %369 = vector.extract_strided_slice %4 {offsets = [0, 0], sizes = [1, 17], strides = [1, 1]} : vector<6x17xf32> to vector<1x17xf32>
    %370 = vector.broadcast %368 : vector<1x1xf32> to vector<1x17xf32>
    %371 = arith.mulf %370, %369 : vector<1x17xf32>
    %372 = arith.addf %366, %371 : vector<1x17xf32>
    %373 = vector.extract_strided_slice %372 {offsets = [0, 12], sizes = [1, 1], strides = [1, 1]} : vector<1x17xf32> to vector<1x1xf32>
    %374 = math.tanh %373 : vector<1x1xf32>
    %375 = vector.extract_strided_slice %4 {offsets = [1, 0], sizes = [1, 17], strides = [1, 1]} : vector<6x17xf32> to vector<1x17xf32>
    %376 = vector.broadcast %374 : vector<1x1xf32> to vector<1x17xf32>
    %377 = arith.mulf %376, %375 : vector<1x17xf32>
    %378 = arith.addf %372, %377 : vector<1x17xf32>
    %379 = vector.extract_strided_slice %378 {offsets = [0, 13], sizes = [1, 1], strides = [1, 1]} : vector<1x17xf32> to vector<1x1xf32>
    %380 = math.tanh %379 : vector<1x1xf32>
    %381 = vector.extract_strided_slice %4 {offsets = [2, 0], sizes = [1, 17], strides = [1, 1]} : vector<6x17xf32> to vector<1x17xf32>
    %382 = vector.broadcast %380 : vector<1x1xf32> to vector<1x17xf32>
    %383 = arith.mulf %382, %381 : vector<1x17xf32>
    %384 = arith.addf %378, %383 : vector<1x17xf32>
    %385 = vector.extract_strided_slice %384 {offsets = [0, 14], sizes = [1, 1], strides = [1, 1]} : vector<1x17xf32> to vector<1x1xf32>
    %386 = math.tanh %385 : vector<1x1xf32>
    %387 = vector.extract_strided_slice %4 {offsets = [3, 0], sizes = [1, 17], strides = [1, 1]} : vector<6x17xf32> to vector<1x17xf32>
    %388 = vector.broadcast %386 : vector<1x1xf32> to vector<1x17xf32>
    %389 = arith.mulf %388, %387 : vector<1x17xf32>
    %390 = arith.addf %384, %389 : vector<1x17xf32>
    %391 = vector.extract_strided_slice %390 {offsets = [0, 15], sizes = [1, 1], strides = [1, 1]} : vector<1x17xf32> to vector<1x1xf32>
    %392 = math.tanh %391 : vector<1x1xf32>
    %393 = vector.extract_strided_slice %4 {offsets = [4, 0], sizes = [1, 17], strides = [1, 1]} : vector<6x17xf32> to vector<1x17xf32>
    %394 = vector.broadcast %392 : vector<1x1xf32> to vector<1x17xf32>
    %395 = arith.mulf %394, %393 : vector<1x17xf32>
    %396 = arith.addf %390, %395 : vector<1x17xf32>
    %397 = vector.extract_strided_slice %396 {offsets = [0, 16], sizes = [1, 1], strides = [1, 1]} : vector<1x17xf32> to vector<1x1xf32>
    %398 = math.tanh %397 : vector<1x1xf32>
    %399 = vector.extract_strided_slice %4 {offsets = [5, 0], sizes = [1, 17], strides = [1, 1]} : vector<6x17xf32> to vector<1x17xf32>
    %400 = vector.broadcast %398 : vector<1x1xf32> to vector<1x17xf32>
    %401 = arith.mulf %400, %399 : vector<1x17xf32>
    %402 = arith.addf %396, %401 : vector<1x17xf32>
    %403 = vector.extract_strided_slice %402 {offsets = [0, 0], sizes = [1, 11], strides = [1, 1]} : vector<1x17xf32> to vector<1x11xf32>
    %404 = vector.extract_strided_slice %402 {offsets = [0, 0], sizes = [1, 8], strides = [1, 1]} : vector<1x17xf32> to vector<1x8xf32>
    %405 = vector.extract_strided_slice %9 {offsets = [5, 0], sizes = [1, 17], strides = [1, 1]} : vector<8x17xf32> to vector<1x17xf32>
    %406 = vector.extract_strided_slice %404 {offsets = [0, 0], sizes = [1, 1], strides = [1, 1]} : vector<1x8xf32> to vector<1x1xf32>
    %407 = vector.extract_strided_slice %3 {offsets = [0, 0], sizes = [1, 17], strides = [1, 1]} : vector<8x17xf32> to vector<1x17xf32>
    %408 = vector.broadcast %406 : vector<1x1xf32> to vector<1x17xf32>
    %409 = arith.mulf %408, %407 : vector<1x17xf32>
    %410 = vector.extract_strided_slice %404 {offsets = [0, 1], sizes = [1, 1], strides = [1, 1]} : vector<1x8xf32> to vector<1x1xf32>
    %411 = vector.extract_strided_slice %3 {offsets = [1, 0], sizes = [1, 17], strides = [1, 1]} : vector<8x17xf32> to vector<1x17xf32>
    %412 = vector.broadcast %410 : vector<1x1xf32> to vector<1x17xf32>
    %413 = arith.mulf %412, %411 : vector<1x17xf32>
    %414 = vector.extract_strided_slice %404 {offsets = [0, 2], sizes = [1, 1], strides = [1, 1]} : vector<1x8xf32> to vector<1x1xf32>
    %415 = vector.extract_strided_slice %3 {offsets = [2, 0], sizes = [1, 17], strides = [1, 1]} : vector<8x17xf32> to vector<1x17xf32>
    %416 = vector.broadcast %414 : vector<1x1xf32> to vector<1x17xf32>
    %417 = arith.mulf %416, %415 : vector<1x17xf32>
    %418 = vector.extract_strided_slice %404 {offsets = [0, 3], sizes = [1, 1], strides = [1, 1]} : vector<1x8xf32> to vector<1x1xf32>
    %419 = vector.extract_strided_slice %3 {offsets = [3, 0], sizes = [1, 17], strides = [1, 1]} : vector<8x17xf32> to vector<1x17xf32>
    %420 = vector.broadcast %418 : vector<1x1xf32> to vector<1x17xf32>
    %421 = arith.mulf %420, %419 : vector<1x17xf32>
    %422 = vector.extract_strided_slice %404 {offsets = [0, 4], sizes = [1, 1], strides = [1, 1]} : vector<1x8xf32> to vector<1x1xf32>
    %423 = vector.extract_strided_slice %3 {offsets = [4, 0], sizes = [1, 17], strides = [1, 1]} : vector<8x17xf32> to vector<1x17xf32>
    %424 = vector.broadcast %422 : vector<1x1xf32> to vector<1x17xf32>
    %425 = arith.mulf %424, %423 : vector<1x17xf32>
    %426 = vector.extract_strided_slice %404 {offsets = [0, 5], sizes = [1, 1], strides = [1, 1]} : vector<1x8xf32> to vector<1x1xf32>
    %427 = vector.extract_strided_slice %3 {offsets = [5, 0], sizes = [1, 17], strides = [1, 1]} : vector<8x17xf32> to vector<1x17xf32>
    %428 = vector.broadcast %426 : vector<1x1xf32> to vector<1x17xf32>
    %429 = arith.mulf %428, %427 : vector<1x17xf32>
    %430 = vector.extract_strided_slice %404 {offsets = [0, 6], sizes = [1, 1], strides = [1, 1]} : vector<1x8xf32> to vector<1x1xf32>
    %431 = vector.extract_strided_slice %3 {offsets = [6, 0], sizes = [1, 17], strides = [1, 1]} : vector<8x17xf32> to vector<1x17xf32>
    %432 = vector.broadcast %430 : vector<1x1xf32> to vector<1x17xf32>
    %433 = arith.mulf %432, %431 : vector<1x17xf32>
    %434 = vector.extract_strided_slice %404 {offsets = [0, 7], sizes = [1, 1], strides = [1, 1]} : vector<1x8xf32> to vector<1x1xf32>
    %435 = vector.extract_strided_slice %3 {offsets = [7, 0], sizes = [1, 17], strides = [1, 1]} : vector<8x17xf32> to vector<1x17xf32>
    %436 = vector.broadcast %434 : vector<1x1xf32> to vector<1x17xf32>
    %437 = arith.mulf %436, %435 : vector<1x17xf32>
    %438 = arith.addf %409, %413 : vector<1x17xf32>
    %439 = arith.addf %417, %421 : vector<1x17xf32>
    %440 = arith.addf %425, %429 : vector<1x17xf32>
    %441 = arith.addf %433, %437 : vector<1x17xf32>
    %442 = arith.addf %438, %439 : vector<1x17xf32>
    %443 = arith.addf %440, %441 : vector<1x17xf32>
    %444 = arith.addf %442, %443 : vector<1x17xf32>
    %445 = arith.addf %405, %444 : vector<1x17xf32>
    %446 = vector.extract_strided_slice %445 {offsets = [0, 11], sizes = [1, 1], strides = [1, 1]} : vector<1x17xf32> to vector<1x1xf32>
    %447 = math.tanh %446 : vector<1x1xf32>
    %448 = vector.extract_strided_slice %4 {offsets = [0, 0], sizes = [1, 17], strides = [1, 1]} : vector<6x17xf32> to vector<1x17xf32>
    %449 = vector.broadcast %447 : vector<1x1xf32> to vector<1x17xf32>
    %450 = arith.mulf %449, %448 : vector<1x17xf32>
    %451 = arith.addf %445, %450 : vector<1x17xf32>
    %452 = vector.extract_strided_slice %451 {offsets = [0, 12], sizes = [1, 1], strides = [1, 1]} : vector<1x17xf32> to vector<1x1xf32>
    %453 = math.tanh %452 : vector<1x1xf32>
    %454 = vector.extract_strided_slice %4 {offsets = [1, 0], sizes = [1, 17], strides = [1, 1]} : vector<6x17xf32> to vector<1x17xf32>
    %455 = vector.broadcast %453 : vector<1x1xf32> to vector<1x17xf32>
    %456 = arith.mulf %455, %454 : vector<1x17xf32>
    %457 = arith.addf %451, %456 : vector<1x17xf32>
    %458 = vector.extract_strided_slice %457 {offsets = [0, 13], sizes = [1, 1], strides = [1, 1]} : vector<1x17xf32> to vector<1x1xf32>
    %459 = math.tanh %458 : vector<1x1xf32>
    %460 = vector.extract_strided_slice %4 {offsets = [2, 0], sizes = [1, 17], strides = [1, 1]} : vector<6x17xf32> to vector<1x17xf32>
    %461 = vector.broadcast %459 : vector<1x1xf32> to vector<1x17xf32>
    %462 = arith.mulf %461, %460 : vector<1x17xf32>
    %463 = arith.addf %457, %462 : vector<1x17xf32>
    %464 = vector.extract_strided_slice %463 {offsets = [0, 14], sizes = [1, 1], strides = [1, 1]} : vector<1x17xf32> to vector<1x1xf32>
    %465 = math.tanh %464 : vector<1x1xf32>
    %466 = vector.extract_strided_slice %4 {offsets = [3, 0], sizes = [1, 17], strides = [1, 1]} : vector<6x17xf32> to vector<1x17xf32>
    %467 = vector.broadcast %465 : vector<1x1xf32> to vector<1x17xf32>
    %468 = arith.mulf %467, %466 : vector<1x17xf32>
    %469 = arith.addf %463, %468 : vector<1x17xf32>
    %470 = vector.extract_strided_slice %469 {offsets = [0, 15], sizes = [1, 1], strides = [1, 1]} : vector<1x17xf32> to vector<1x1xf32>
    %471 = math.tanh %470 : vector<1x1xf32>
    %472 = vector.extract_strided_slice %4 {offsets = [4, 0], sizes = [1, 17], strides = [1, 1]} : vector<6x17xf32> to vector<1x17xf32>
    %473 = vector.broadcast %471 : vector<1x1xf32> to vector<1x17xf32>
    %474 = arith.mulf %473, %472 : vector<1x17xf32>
    %475 = arith.addf %469, %474 : vector<1x17xf32>
    %476 = vector.extract_strided_slice %475 {offsets = [0, 16], sizes = [1, 1], strides = [1, 1]} : vector<1x17xf32> to vector<1x1xf32>
    %477 = math.tanh %476 : vector<1x1xf32>
    %478 = vector.extract_strided_slice %4 {offsets = [5, 0], sizes = [1, 17], strides = [1, 1]} : vector<6x17xf32> to vector<1x17xf32>
    %479 = vector.broadcast %477 : vector<1x1xf32> to vector<1x17xf32>
    %480 = arith.mulf %479, %478 : vector<1x17xf32>
    %481 = arith.addf %475, %480 : vector<1x17xf32>
    %482 = vector.extract_strided_slice %481 {offsets = [0, 0], sizes = [1, 11], strides = [1, 1]} : vector<1x17xf32> to vector<1x11xf32>
    %483 = vector.extract_strided_slice %481 {offsets = [0, 0], sizes = [1, 8], strides = [1, 1]} : vector<1x17xf32> to vector<1x8xf32>
    %484 = vector.extract_strided_slice %9 {offsets = [6, 0], sizes = [1, 17], strides = [1, 1]} : vector<8x17xf32> to vector<1x17xf32>
    %485 = vector.extract_strided_slice %483 {offsets = [0, 0], sizes = [1, 1], strides = [1, 1]} : vector<1x8xf32> to vector<1x1xf32>
    %486 = vector.extract_strided_slice %3 {offsets = [0, 0], sizes = [1, 17], strides = [1, 1]} : vector<8x17xf32> to vector<1x17xf32>
    %487 = vector.broadcast %485 : vector<1x1xf32> to vector<1x17xf32>
    %488 = arith.mulf %487, %486 : vector<1x17xf32>
    %489 = vector.extract_strided_slice %483 {offsets = [0, 1], sizes = [1, 1], strides = [1, 1]} : vector<1x8xf32> to vector<1x1xf32>
    %490 = vector.extract_strided_slice %3 {offsets = [1, 0], sizes = [1, 17], strides = [1, 1]} : vector<8x17xf32> to vector<1x17xf32>
    %491 = vector.broadcast %489 : vector<1x1xf32> to vector<1x17xf32>
    %492 = arith.mulf %491, %490 : vector<1x17xf32>
    %493 = vector.extract_strided_slice %483 {offsets = [0, 2], sizes = [1, 1], strides = [1, 1]} : vector<1x8xf32> to vector<1x1xf32>
    %494 = vector.extract_strided_slice %3 {offsets = [2, 0], sizes = [1, 17], strides = [1, 1]} : vector<8x17xf32> to vector<1x17xf32>
    %495 = vector.broadcast %493 : vector<1x1xf32> to vector<1x17xf32>
    %496 = arith.mulf %495, %494 : vector<1x17xf32>
    %497 = vector.extract_strided_slice %483 {offsets = [0, 3], sizes = [1, 1], strides = [1, 1]} : vector<1x8xf32> to vector<1x1xf32>
    %498 = vector.extract_strided_slice %3 {offsets = [3, 0], sizes = [1, 17], strides = [1, 1]} : vector<8x17xf32> to vector<1x17xf32>
    %499 = vector.broadcast %497 : vector<1x1xf32> to vector<1x17xf32>
    %500 = arith.mulf %499, %498 : vector<1x17xf32>
    %501 = vector.extract_strided_slice %483 {offsets = [0, 4], sizes = [1, 1], strides = [1, 1]} : vector<1x8xf32> to vector<1x1xf32>
    %502 = vector.extract_strided_slice %3 {offsets = [4, 0], sizes = [1, 17], strides = [1, 1]} : vector<8x17xf32> to vector<1x17xf32>
    %503 = vector.broadcast %501 : vector<1x1xf32> to vector<1x17xf32>
    %504 = arith.mulf %503, %502 : vector<1x17xf32>
    %505 = vector.extract_strided_slice %483 {offsets = [0, 5], sizes = [1, 1], strides = [1, 1]} : vector<1x8xf32> to vector<1x1xf32>
    %506 = vector.extract_strided_slice %3 {offsets = [5, 0], sizes = [1, 17], strides = [1, 1]} : vector<8x17xf32> to vector<1x17xf32>
    %507 = vector.broadcast %505 : vector<1x1xf32> to vector<1x17xf32>
    %508 = arith.mulf %507, %506 : vector<1x17xf32>
    %509 = vector.extract_strided_slice %483 {offsets = [0, 6], sizes = [1, 1], strides = [1, 1]} : vector<1x8xf32> to vector<1x1xf32>
    %510 = vector.extract_strided_slice %3 {offsets = [6, 0], sizes = [1, 17], strides = [1, 1]} : vector<8x17xf32> to vector<1x17xf32>
    %511 = vector.broadcast %509 : vector<1x1xf32> to vector<1x17xf32>
    %512 = arith.mulf %511, %510 : vector<1x17xf32>
    %513 = vector.extract_strided_slice %483 {offsets = [0, 7], sizes = [1, 1], strides = [1, 1]} : vector<1x8xf32> to vector<1x1xf32>
    %514 = vector.extract_strided_slice %3 {offsets = [7, 0], sizes = [1, 17], strides = [1, 1]} : vector<8x17xf32> to vector<1x17xf32>
    %515 = vector.broadcast %513 : vector<1x1xf32> to vector<1x17xf32>
    %516 = arith.mulf %515, %514 : vector<1x17xf32>
    %517 = arith.addf %488, %492 : vector<1x17xf32>
    %518 = arith.addf %496, %500 : vector<1x17xf32>
    %519 = arith.addf %504, %508 : vector<1x17xf32>
    %520 = arith.addf %512, %516 : vector<1x17xf32>
    %521 = arith.addf %517, %518 : vector<1x17xf32>
    %522 = arith.addf %519, %520 : vector<1x17xf32>
    %523 = arith.addf %521, %522 : vector<1x17xf32>
    %524 = arith.addf %484, %523 : vector<1x17xf32>
    %525 = vector.extract_strided_slice %524 {offsets = [0, 11], sizes = [1, 1], strides = [1, 1]} : vector<1x17xf32> to vector<1x1xf32>
    %526 = math.tanh %525 : vector<1x1xf32>
    %527 = vector.extract_strided_slice %4 {offsets = [0, 0], sizes = [1, 17], strides = [1, 1]} : vector<6x17xf32> to vector<1x17xf32>
    %528 = vector.broadcast %526 : vector<1x1xf32> to vector<1x17xf32>
    %529 = arith.mulf %528, %527 : vector<1x17xf32>
    %530 = arith.addf %524, %529 : vector<1x17xf32>
    %531 = vector.extract_strided_slice %530 {offsets = [0, 12], sizes = [1, 1], strides = [1, 1]} : vector<1x17xf32> to vector<1x1xf32>
    %532 = math.tanh %531 : vector<1x1xf32>
    %533 = vector.extract_strided_slice %4 {offsets = [1, 0], sizes = [1, 17], strides = [1, 1]} : vector<6x17xf32> to vector<1x17xf32>
    %534 = vector.broadcast %532 : vector<1x1xf32> to vector<1x17xf32>
    %535 = arith.mulf %534, %533 : vector<1x17xf32>
    %536 = arith.addf %530, %535 : vector<1x17xf32>
    %537 = vector.extract_strided_slice %536 {offsets = [0, 13], sizes = [1, 1], strides = [1, 1]} : vector<1x17xf32> to vector<1x1xf32>
    %538 = math.tanh %537 : vector<1x1xf32>
    %539 = vector.extract_strided_slice %4 {offsets = [2, 0], sizes = [1, 17], strides = [1, 1]} : vector<6x17xf32> to vector<1x17xf32>
    %540 = vector.broadcast %538 : vector<1x1xf32> to vector<1x17xf32>
    %541 = arith.mulf %540, %539 : vector<1x17xf32>
    %542 = arith.addf %536, %541 : vector<1x17xf32>
    %543 = vector.extract_strided_slice %542 {offsets = [0, 14], sizes = [1, 1], strides = [1, 1]} : vector<1x17xf32> to vector<1x1xf32>
    %544 = math.tanh %543 : vector<1x1xf32>
    %545 = vector.extract_strided_slice %4 {offsets = [3, 0], sizes = [1, 17], strides = [1, 1]} : vector<6x17xf32> to vector<1x17xf32>
    %546 = vector.broadcast %544 : vector<1x1xf32> to vector<1x17xf32>
    %547 = arith.mulf %546, %545 : vector<1x17xf32>
    %548 = arith.addf %542, %547 : vector<1x17xf32>
    %549 = vector.extract_strided_slice %548 {offsets = [0, 15], sizes = [1, 1], strides = [1, 1]} : vector<1x17xf32> to vector<1x1xf32>
    %550 = math.tanh %549 : vector<1x1xf32>
    %551 = vector.extract_strided_slice %4 {offsets = [4, 0], sizes = [1, 17], strides = [1, 1]} : vector<6x17xf32> to vector<1x17xf32>
    %552 = vector.broadcast %550 : vector<1x1xf32> to vector<1x17xf32>
    %553 = arith.mulf %552, %551 : vector<1x17xf32>
    %554 = arith.addf %548, %553 : vector<1x17xf32>
    %555 = vector.extract_strided_slice %554 {offsets = [0, 16], sizes = [1, 1], strides = [1, 1]} : vector<1x17xf32> to vector<1x1xf32>
    %556 = math.tanh %555 : vector<1x1xf32>
    %557 = vector.extract_strided_slice %4 {offsets = [5, 0], sizes = [1, 17], strides = [1, 1]} : vector<6x17xf32> to vector<1x17xf32>
    %558 = vector.broadcast %556 : vector<1x1xf32> to vector<1x17xf32>
    %559 = arith.mulf %558, %557 : vector<1x17xf32>
    %560 = arith.addf %554, %559 : vector<1x17xf32>
    %561 = vector.extract_strided_slice %560 {offsets = [0, 0], sizes = [1, 11], strides = [1, 1]} : vector<1x17xf32> to vector<1x11xf32>
    %562 = vector.extract_strided_slice %560 {offsets = [0, 0], sizes = [1, 8], strides = [1, 1]} : vector<1x17xf32> to vector<1x8xf32>
    %563 = vector.extract_strided_slice %9 {offsets = [7, 0], sizes = [1, 17], strides = [1, 1]} : vector<8x17xf32> to vector<1x17xf32>
    %564 = vector.extract_strided_slice %562 {offsets = [0, 0], sizes = [1, 1], strides = [1, 1]} : vector<1x8xf32> to vector<1x1xf32>
    %565 = vector.extract_strided_slice %3 {offsets = [0, 0], sizes = [1, 17], strides = [1, 1]} : vector<8x17xf32> to vector<1x17xf32>
    %566 = vector.broadcast %564 : vector<1x1xf32> to vector<1x17xf32>
    %567 = arith.mulf %566, %565 : vector<1x17xf32>
    %568 = vector.extract_strided_slice %562 {offsets = [0, 1], sizes = [1, 1], strides = [1, 1]} : vector<1x8xf32> to vector<1x1xf32>
    %569 = vector.extract_strided_slice %3 {offsets = [1, 0], sizes = [1, 17], strides = [1, 1]} : vector<8x17xf32> to vector<1x17xf32>
    %570 = vector.broadcast %568 : vector<1x1xf32> to vector<1x17xf32>
    %571 = arith.mulf %570, %569 : vector<1x17xf32>
    %572 = vector.extract_strided_slice %562 {offsets = [0, 2], sizes = [1, 1], strides = [1, 1]} : vector<1x8xf32> to vector<1x1xf32>
    %573 = vector.extract_strided_slice %3 {offsets = [2, 0], sizes = [1, 17], strides = [1, 1]} : vector<8x17xf32> to vector<1x17xf32>
    %574 = vector.broadcast %572 : vector<1x1xf32> to vector<1x17xf32>
    %575 = arith.mulf %574, %573 : vector<1x17xf32>
    %576 = vector.extract_strided_slice %562 {offsets = [0, 3], sizes = [1, 1], strides = [1, 1]} : vector<1x8xf32> to vector<1x1xf32>
    %577 = vector.extract_strided_slice %3 {offsets = [3, 0], sizes = [1, 17], strides = [1, 1]} : vector<8x17xf32> to vector<1x17xf32>
    %578 = vector.broadcast %576 : vector<1x1xf32> to vector<1x17xf32>
    %579 = arith.mulf %578, %577 : vector<1x17xf32>
    %580 = vector.extract_strided_slice %562 {offsets = [0, 4], sizes = [1, 1], strides = [1, 1]} : vector<1x8xf32> to vector<1x1xf32>
    %581 = vector.extract_strided_slice %3 {offsets = [4, 0], sizes = [1, 17], strides = [1, 1]} : vector<8x17xf32> to vector<1x17xf32>
    %582 = vector.broadcast %580 : vector<1x1xf32> to vector<1x17xf32>
    %583 = arith.mulf %582, %581 : vector<1x17xf32>
    %584 = vector.extract_strided_slice %562 {offsets = [0, 5], sizes = [1, 1], strides = [1, 1]} : vector<1x8xf32> to vector<1x1xf32>
    %585 = vector.extract_strided_slice %3 {offsets = [5, 0], sizes = [1, 17], strides = [1, 1]} : vector<8x17xf32> to vector<1x17xf32>
    %586 = vector.broadcast %584 : vector<1x1xf32> to vector<1x17xf32>
    %587 = arith.mulf %586, %585 : vector<1x17xf32>
    %588 = vector.extract_strided_slice %562 {offsets = [0, 6], sizes = [1, 1], strides = [1, 1]} : vector<1x8xf32> to vector<1x1xf32>
    %589 = vector.extract_strided_slice %3 {offsets = [6, 0], sizes = [1, 17], strides = [1, 1]} : vector<8x17xf32> to vector<1x17xf32>
    %590 = vector.broadcast %588 : vector<1x1xf32> to vector<1x17xf32>
    %591 = arith.mulf %590, %589 : vector<1x17xf32>
    %592 = vector.extract_strided_slice %562 {offsets = [0, 7], sizes = [1, 1], strides = [1, 1]} : vector<1x8xf32> to vector<1x1xf32>
    %593 = vector.extract_strided_slice %3 {offsets = [7, 0], sizes = [1, 17], strides = [1, 1]} : vector<8x17xf32> to vector<1x17xf32>
    %594 = vector.broadcast %592 : vector<1x1xf32> to vector<1x17xf32>
    %595 = arith.mulf %594, %593 : vector<1x17xf32>
    %596 = arith.addf %567, %571 : vector<1x17xf32>
    %597 = arith.addf %575, %579 : vector<1x17xf32>
    %598 = arith.addf %583, %587 : vector<1x17xf32>
    %599 = arith.addf %591, %595 : vector<1x17xf32>
    %600 = arith.addf %596, %597 : vector<1x17xf32>
    %601 = arith.addf %598, %599 : vector<1x17xf32>
    %602 = arith.addf %600, %601 : vector<1x17xf32>
    %603 = arith.addf %563, %602 : vector<1x17xf32>
    %604 = vector.extract_strided_slice %603 {offsets = [0, 11], sizes = [1, 1], strides = [1, 1]} : vector<1x17xf32> to vector<1x1xf32>
    %605 = math.tanh %604 : vector<1x1xf32>
    %606 = vector.extract_strided_slice %4 {offsets = [0, 0], sizes = [1, 17], strides = [1, 1]} : vector<6x17xf32> to vector<1x17xf32>
    %607 = vector.broadcast %605 : vector<1x1xf32> to vector<1x17xf32>
    %608 = arith.mulf %607, %606 : vector<1x17xf32>
    %609 = arith.addf %603, %608 : vector<1x17xf32>
    %610 = vector.extract_strided_slice %609 {offsets = [0, 12], sizes = [1, 1], strides = [1, 1]} : vector<1x17xf32> to vector<1x1xf32>
    %611 = math.tanh %610 : vector<1x1xf32>
    %612 = vector.extract_strided_slice %4 {offsets = [1, 0], sizes = [1, 17], strides = [1, 1]} : vector<6x17xf32> to vector<1x17xf32>
    %613 = vector.broadcast %611 : vector<1x1xf32> to vector<1x17xf32>
    %614 = arith.mulf %613, %612 : vector<1x17xf32>
    %615 = arith.addf %609, %614 : vector<1x17xf32>
    %616 = vector.extract_strided_slice %615 {offsets = [0, 13], sizes = [1, 1], strides = [1, 1]} : vector<1x17xf32> to vector<1x1xf32>
    %617 = math.tanh %616 : vector<1x1xf32>
    %618 = vector.extract_strided_slice %4 {offsets = [2, 0], sizes = [1, 17], strides = [1, 1]} : vector<6x17xf32> to vector<1x17xf32>
    %619 = vector.broadcast %617 : vector<1x1xf32> to vector<1x17xf32>
    %620 = arith.mulf %619, %618 : vector<1x17xf32>
    %621 = arith.addf %615, %620 : vector<1x17xf32>
    %622 = vector.extract_strided_slice %621 {offsets = [0, 14], sizes = [1, 1], strides = [1, 1]} : vector<1x17xf32> to vector<1x1xf32>
    %623 = math.tanh %622 : vector<1x1xf32>
    %624 = vector.extract_strided_slice %4 {offsets = [3, 0], sizes = [1, 17], strides = [1, 1]} : vector<6x17xf32> to vector<1x17xf32>
    %625 = vector.broadcast %623 : vector<1x1xf32> to vector<1x17xf32>
    %626 = arith.mulf %625, %624 : vector<1x17xf32>
    %627 = arith.addf %621, %626 : vector<1x17xf32>
    %628 = vector.extract_strided_slice %627 {offsets = [0, 15], sizes = [1, 1], strides = [1, 1]} : vector<1x17xf32> to vector<1x1xf32>
    %629 = math.tanh %628 : vector<1x1xf32>
    %630 = vector.extract_strided_slice %4 {offsets = [4, 0], sizes = [1, 17], strides = [1, 1]} : vector<6x17xf32> to vector<1x17xf32>
    %631 = vector.broadcast %629 : vector<1x1xf32> to vector<1x17xf32>
    %632 = arith.mulf %631, %630 : vector<1x17xf32>
    %633 = arith.addf %627, %632 : vector<1x17xf32>
    %634 = vector.extract_strided_slice %633 {offsets = [0, 16], sizes = [1, 1], strides = [1, 1]} : vector<1x17xf32> to vector<1x1xf32>
    %635 = math.tanh %634 : vector<1x1xf32>
    %636 = vector.extract_strided_slice %4 {offsets = [5, 0], sizes = [1, 17], strides = [1, 1]} : vector<6x17xf32> to vector<1x17xf32>
    %637 = vector.broadcast %635 : vector<1x1xf32> to vector<1x17xf32>
    %638 = arith.mulf %637, %636 : vector<1x17xf32>
    %639 = arith.addf %633, %638 : vector<1x17xf32>
    %640 = vector.extract_strided_slice %639 {offsets = [0, 0], sizes = [1, 11], strides = [1, 1]} : vector<1x17xf32> to vector<1x11xf32>
    %641 = vector.extract_strided_slice %639 {offsets = [0, 0], sizes = [1, 8], strides = [1, 1]} : vector<1x17xf32> to vector<1x8xf32>
    %642 = tpu.concatenate %87, %166, %245, %324, %403, %482, %561, %640 in 0 : vector<1x11xf32>, vector<1x11xf32>, vector<1x11xf32>, vector<1x11xf32>, vector<1x11xf32>, vector<1x11xf32>, vector<1x11xf32>, vector<1x11xf32> -> vector<8x11xf32>
    %643 = arith.index_cast %7 : i32 to index
    %c0_8 = arith.constant 0 : index
    %644 = vector.load %arg5[%643, %c0_8] : memref<8x11xf32, #tpu.memory_space<vmem>>, vector<8x11xf32>
    tpu.vector_store %arg5[%643, %c0_8], %642 {strides = array<i32>} : memref<8x11xf32, #tpu.memory_space<vmem>>, vector<8x11xf32>,
    %c1_i32 = arith.constant 1 : i32
    %c0_9 = arith.constant 0 : index
    %c0_10 = arith.constant 0 : index
    %645 = vector.load %arg6[%c0_9, %c0_10] : memref<1x8xf32, #tpu.memory_space<vmem>>, vector<1x8xf32>
    tpu.vector_store %arg6[%c0_9, %c0_10], %641 {strides = array<i32>} : memref<1x8xf32, #tpu.memory_space<vmem>>, vector<1x8xf32>,
    return
  }
  func.func @transform_0(%arg0: i32) -> (i32, i32) {
    %c0_i32 = arith.constant 0 : i32
    %c0_i32_0 = arith.constant 0 : i32
    %c0_i32_1 = arith.constant 0 : i32
    return %c0_i32, %c0_i32_0 : i32, i32
  }
  func.func @transform_1(%arg0: i32) -> (i32, i32) {
    %c0_i32 = arith.constant 0 : i32
    %c0_i32_0 = arith.constant 0 : i32
    %c0_i32_1 = arith.constant 0 : i32
    return %c0_i32, %c0_i32_0 : i32, i32
  }
  func.func @transform_2(%arg0: i32) -> (i32, i32) {
    %c0_i32 = arith.constant 0 : i32
    %c0_i32_0 = arith.constant 0 : i32
    %c0_i32_1 = arith.constant 0 : i32
    return %c0_i32, %c0_i32_0 : i32, i32
  }
  func.func @transform_3(%arg0: i32) -> (i32, i32) {
    %c0_i32 = arith.constant 0 : i32
    %c0_i32_0 = arith.constant 0 : i32
    return %arg0, %c0_i32 : i32, i32
  }
  func.func @transform_4(%arg0: i32) -> (i32, i32) {
    %c0_i32 = arith.constant 0 : i32
    %c0_i32_0 = arith.constant 0 : i32
    return %arg0, %c0_i32 : i32, i32
  }
}

</mosaic_0001>

<llo_original>
// kernel: _ren_rollout.1
$region0: #{_ren_rollout.1}
  #allocation0 [shape = 'u32[]', space=smem, size = 0x4, offset = 0x4, fixed_abs, tag = 'smem constant byte address 0x4 - core index']
  #allocation1 [shape = 'u32[144,128]{1,0:T(1,128)}', space=vmem, size = 0x12000, scoped, tag = 'internal scratch']
  #allocation2 [shape = 'f32[1,8]{1,0:T(1,128)}', space=vmem, size = 0x200, scoped, tag = 'scratch operand']
  %s0 = inlined_call_operand.vmem [shape: f32[8,17], index: 0, kind: input, shape index: {}]
  %s1 = inlined_call_operand.vmem [shape: f32[6,17], index: 1, kind: input, shape index: {}]
  %s2 = inlined_call_operand.vmem [shape: f32[1,8], index: 2, kind: input, shape index: {}]
  %s3 = inlined_call_operand.vmem [shape: f32[8,17], index: 3, kind: input, shape index: {}]
  %s4 = inlined_call_operand.vmem [shape: f32[8,11], index: 4, kind: output, shape index: {}]
  %s5 = sld [smem:[#allocation0]]
  $region30: #{_ren_rollout.1} parent=0
    _
  %s7 = ssub.s32 1, %s5
  %s8 = scalar_select 0, %s7, %s5
  // Predicated region
  $region2: #{_ren_rollout.1} parent=0 // pred_check
    _
  $region3: #{_ren_rollout.1} parent=0 // pred_check_branch
    %10 = sbr.rel (0) target = $region5
  $region4: #{_ren_rollout.1} parent=0 // pred_region
    _
  $region5: #{_ren_rollout.1} parent=0 // pred_fallthru
    _
  // Predicated region
  $region6: #{_ren_rollout.1} parent=0 // pred_check
    _
  $region7: #{_ren_rollout.1} parent=0 // pred_check_branch
    %12 = sbr.rel (0) target = $region9
  $region8: #{_ren_rollout.1} parent=0 // pred_region
    _
  $region9: #{_ren_rollout.1} parent=0 // pred_fallthru
    _
  // Predicated region
  $region10: #{_ren_rollout.1} parent=0 // pred_check
    _
  $region11: #{_ren_rollout.1} parent=0 // pred_check_branch
    %14 = sbr.rel (0) target = $region13
  $region12: #{_ren_rollout.1} parent=0 // pred_region
    _
  $region13: #{_ren_rollout.1} parent=0 // pred_fallthru
    _
  // Predicated region
  $region14: #{_ren_rollout.1} parent=0 // pred_check
    _
  $region15: #{_ren_rollout.1} parent=0 // pred_check_branch
    %16 = sbr.rel (0) target = $region17
  $region16: #{_ren_rollout.1} parent=0 // pred_region
    _
  $region17: #{_ren_rollout.1} parent=0 // pred_fallthru
    _
  %p17 = scmp.eq.s32.totalorder 0, 0
  // Predicated region
  $region18: #{_ren_rollout.1} parent=0 // pred_check
    %p18 = pneg %p17
  $region19: #{_ren_rollout.1} parent=0 // pred_check_branch
    %20 = sbr.rel (%p18) target = $region21
  $region20: #{_ren_rollout.1} parent=0 // pred_region
    %v21 = vld [vmem:[%s2] sm:$0x1]
    %vm22 = vcmask 57344
    %23 = vst.msk [vmem:[#allocation2] sm:$0x1] %vm22, %v21
  $region21: #{_ren_rollout.1} parent=0 // pred_fallthru
    _
  %v24 = vld [vmem:[%s0] sm:$0xff]
  %v25 = vld [vmem:[%s1] sm:$0x3f]
  %v26 = vld [vmem:[#allocation2] sm:$0x1]
  %v27 = vld [vmem:[%s3] sm:$0xff]
  %29 = vset.pattern.permute.xlu0 0
  %30 = vperm.xlu0 %29, %v26
  %v31 = vpop.permute.xlu0 %30
  %v33 = vlaneseq
  %v34 = vshrl.u32 %v33, 7
  %v35 = vsub.s32 0, %v34
  %v36 = vrot.slane %v31, %v35
  %v37 = vmul.f32 %v36, %v24
  %38 = vset.pattern.permute.xlu0 1
  %39 = vperm.xlu0 %38, %v26
  %v40 = vpop.permute.xlu0 %39
  %v42 = vlaneseq
  %v43 = vshrl.u32 %v42, 7
  %v44 = vsub.s32 0, %v43
  %v45 = vrot.slane %v40, %v44
  %v46 = vmul.f32 %v45, %v24
  %47 = vset.pattern.permute.xlu0 2
  %48 = vperm.xlu0 %47, %v26
  %v49 = vpop.permute.xlu0 %48
  %v51 = vlaneseq
  %v52 = vshrl.u32 %v51, 7
  %v53 = vsub.s32 0, %v52
  %v54 = vrot.slane %v49, %v53
  %v55 = vmul.f32 %v54, %v24
  %56 = vset.pattern.permute.xlu0 3
  %57 = vperm.xlu0 %56, %v26
  %v58 = vpop.permute.xlu0 %57
  %v60 = vlaneseq
  %v61 = vshrl.u32 %v60, 7
  %v62 = vsub.s32 0, %v61
  %v63 = vrot.slane %v58, %v62
  %v64 = vmul.f32 %v63, %v24
  %65 = vset.pattern.permute.xlu0 4
  %66 = vperm.xlu0 %65, %v26
  %v67 = vpop.permute.xlu0 %66
  %v69 = vlaneseq
  %v70 = vshrl.u32 %v69, 7
  %v71 = vsub.s32 0, %v70
  %v72 = vrot.slane %v67, %v71
  %v73 = vmul.f32 %v72, %v24
  %74 = vset.pattern.permute.xlu0 5
  %75 = vperm.xlu0 %74, %v26
  %v76 = vpop.permute.xlu0 %75
  %v78 = vlaneseq
  %v79 = vshrl.u32 %v78, 7
  %v80 = vsub.s32 0, %v79
  %v81 = vrot.slane %v76, %v80
  %v82 = vmul.f32 %v81, %v24
  %83 = vset.pattern.permute.xlu0 6
  %84 = vperm.xlu0 %83, %v26
  %v85 = vpop.permute.xlu0 %84
  %v87 = vlaneseq
  %v88 = vshrl.u32 %v87, 7
  %v89 = vsub.s32 0, %v88
  %v90 = vrot.slane %v85, %v89
  %v91 = vmul.f32 %v90, %v24
  %92 = vset.pattern.permute.xlu0 7
  %93 = vperm.xlu0 %92, %v26
  %v94 = vpop.permute.xlu0 %93
  %v96 = vlaneseq
  %v97 = vshrl.u32 %v96, 7
  %v98 = vsub.s32 0, %v97
  %v99 = vrot.slane %v94, %v98
  %v100 = vmul.f32 %v99, %v24
  %v102 = vrot.slane %v46, 1
  %v104 = vadd.f32 %v37, %v102
  %v106 = vrot.slane %v64, 1
  %v108 = vadd.f32 %v55, %v106
  %v110 = vrot.slane %v82, 1
  %v112 = vadd.f32 %v73, %v110
  %v114 = vrot.slane %v100, 1
  %v116 = vadd.f32 %v91, %v114
  %v118 = vrot.slane %v108, 2
  %v120 = vadd.f32 %v104, %v118
  %v122 = vrot.slane %v116, 2
  %v124 = vadd.f32 %v112, %v122
  %v126 = vrot.slane %v124, 4
  %v128 = vadd.f32 %v120, %v126
  %v129 = vadd.f32 %v27, %v128
  %v130 = vtanh.pop %v129
  %132 = vset.pattern.permute.xlu0 11
  %133 = vperm.xlu0 %132, %v130
  %v134 = vpop.permute.xlu0 %133
  %v136 = vmul.f32 %v134, %v25
  %v137 = vadd.f32 %v129, %v136
  %v138 = vtanh.pop %v137
  %140 = vset.pattern.permute.xlu0 12
  %141 = vperm.xlu0 %140, %v138
  %v142 = vpop.permute.xlu0 %141
  %v145 = vrot.slane %v25, 1
  %v147 = vmul.f32 %v142, %v145
  %v148 = vadd.f32 %v137, %v147
  %v149 = vtanh.pop %v148
  %151 = vset.pattern.permute.xlu0 13
  %152 = vperm.xlu0 %151, %v149
  %v153 = vpop.permute.xlu0 %152
  %v155 = vrot.slane %v25, 2
  %v157 = vmul.f32 %v153, %v155
  %v158 = vadd.f32 %v148, %v157
  %v159 = vtanh.pop %v158
  %161 = vset.pattern.permute.xlu0 14
  %162 = vperm.xlu0 %161, %v159
  %v163 = vpop.permute.xlu0 %162
  %v165 = vrot.slane %v25, 3
  %v167 = vmul.f32 %v163, %v165
  %v168 = vadd.f32 %v158, %v167
  %v169 = vtanh.pop %v168
  %171 = vset.pattern.permute.xlu0 15
  %172 = vperm.xlu0 %171, %v169
  %v173 = vpop.permute.xlu0 %172
  %v175 = vrot.slane %v25, 4
  %v177 = vmul.f32 %v173, %v175
  %v178 = vadd.f32 %v168, %v177
  %v179 = vtanh.pop %v178
  %181 = vset.pattern.permute.xlu0 16
  %182 = vperm.xlu0 %181, %v179
  %v183 = vpop.permute.xlu0 %182
  %v185 = vrot.slane %v25, 5
  %v187 = vmul.f32 %v183, %v185
  %v188 = vadd.f32 %v178, %v187
  %190 = vset.pattern.permute.xlu0 0
  %191 = vperm.xlu0 %190, %v188
  %v192 = vpop.permute.xlu0 %191
  %v194 = vmul.f32 %v192, %v24
  %195 = vset.pattern.permute.xlu0 1
  %196 = vperm.xlu0 %195, %v188
  %v197 = vpop.permute.xlu0 %196
  %v200 = vrot.slane %v24, 1
  %v202 = vmul.f32 %v197, %v200
  %203 = vset.pattern.permute.xlu0 2
  %204 = vperm.xlu0 %203, %v188
  %v205 = vpop.permute.xlu0 %204
  %v207 = vrot.slane %v24, 2
  %v209 = vmul.f32 %v205, %v207
  %210 = vset.pattern.permute.xlu0 3
  %211 = vperm.xlu0 %210, %v188
  %v212 = vpop.permute.xlu0 %211
  %v214 = vrot.slane %v24, 3
  %v216 = vmul.f32 %v212, %v214
  %217 = vset.pattern.permute.xlu0 4
  %218 = vperm.xlu0 %217, %v188
  %v219 = vpop.permute.xlu0 %218
  %v221 = vrot.slane %v24, 4
  %v223 = vmul.f32 %v219, %v221
  %224 = vset.pattern.permute.xlu0 5
  %225 = vperm.xlu0 %224, %v188
  %v226 = vpop.permute.xlu0 %225
  %v228 = vrot.slane %v24, 5
  %v230 = vmul.f32 %v226, %v228
  %231 = vset.pattern.permute.xlu0 6
  %232 = vperm.xlu0 %231, %v188
  %v233 = vpop.permute.xlu0 %232
  %v235 = vrot.slane %v24, 6
  %v237 = vmul.f32 %v233, %v235
  %238 = vset.pattern.permute.xlu0 7
  %239 = vperm.xlu0 %238, %v188
  %v240 = vpop.permute.xlu0 %239
  %v242 = vrot.slane %v24, 7
  %v244 = vmul.f32 %v240, %v242
  %v245 = vadd.f32 %v194, %v202
  %v246 = vadd.f32 %v209, %v216
  %v247 = vadd.f32 %v223, %v230
  %v248 = vadd.f32 %v237, %v244
  %v249 = vadd.f32 %v245, %v246
  %v250 = vadd.f32 %v247, %v248
  %v251 = vadd.f32 %v249, %v250
  %v253 = vrot.slane %v251, 7
  %v255 = vadd.f32 %v27, %v253
  %v256 = vtanh.pop %v255
  %258 = vset.pattern.permute.xlu0 11
  %259 = vperm.xlu0 %258, %v256
  %v260 = vpop.permute.xlu0 %259
  %v262 = vrot.slane %v25, 7
  %v264 = vmul.f32 %v260, %v262
  %v265 = vadd.f32 %v255, %v264
  %v266 = vtanh.pop %v265
  %268 = vset.pattern.permute.xlu0 12
  %269 = vperm.xlu0 %268, %v266
  %v270 = vpop.permute.xlu0 %269
  %v272 = vmul.f32 %v270, %v25
  %v273 = vadd.f32 %v265, %v272
  %v274 = vtanh.pop %v273
  %276 = vset.pattern.permute.xlu0 13
  %277 = vperm.xlu0 %276, %v274
  %v278 = vpop.permute.xlu0 %277
  %v280 = vmul.f32 %v278, %v145
  %v281 = vadd.f32 %v273, %v280
  %v282 = vtanh.pop %v281
  %284 = vset.pattern.permute.xlu0 14
  %285 = vperm.xlu0 %284, %v282
  %v286 = vpop.permute.xlu0 %285
  %v288 = vmul.f32 %v286, %v155
  %v289 = vadd.f32 %v281, %v288
  %v290 = vtanh.pop %v289
  %292 = vset.pattern.permute.xlu0 15
  %293 = vperm.xlu0 %292, %v290
  %v294 = vpop.permute.xlu0 %293
  %v296 = vmul.f32 %v294, %v165
  %v297 = vadd.f32 %v289, %v296
  %v298 = vtanh.pop %v297
  %300 = vset.pattern.permute.xlu0 16
  %301 = vperm.xlu0 %300, %v298
  %v302 = vpop.permute.xlu0 %301
  %v304 = vmul.f32 %v302, %v175
  %v305 = vadd.f32 %v297, %v304
  %307 = vset.pattern.permute.xlu0 0
  %308 = vperm.xlu0 %307, %v305
  %v309 = vpop.permute.xlu0 %308
  %v311 = vmul.f32 %v309, %v242
  %312 = vset.pattern.permute.xlu0 1
  %313 = vperm.xlu0 %312, %v305
  %v314 = vpop.permute.xlu0 %313
  %v316 = vmul.f32 %v314, %v24
  %317 = vset.pattern.permute.xlu0 2
  %318 = vperm.xlu0 %317, %v305
  %v319 = vpop.permute.xlu0 %318
  %v321 = vmul.f32 %v319, %v200
  %322 = vset.pattern.permute.xlu0 3
  %323 = vperm.xlu0 %322, %v305
  %v324 = vpop.permute.xlu0 %323
  %v326 = vmul.f32 %v324, %v207
  %327 = vset.pattern.permute.xlu0 4
  %328 = vperm.xlu0 %327, %v305
  %v329 = vpop.permute.xlu0 %328
  %v331 = vmul.f32 %v329, %v214
  %332 = vset.pattern.permute.xlu0 5
  %333 = vperm.xlu0 %332, %v305
  %v334 = vpop.permute.xlu0 %333
  %v336 = vmul.f32 %v334, %v221
  %337 = vset.pattern.permute.xlu0 6
  %338 = vperm.xlu0 %337, %v305
  %v339 = vpop.permute.xlu0 %338
  %v341 = vmul.f32 %v339, %v228
  %342 = vset.pattern.permute.xlu0 7
  %343 = vperm.xlu0 %342, %v305
  %v344 = vpop.permute.xlu0 %343
  %v346 = vmul.f32 %v344, %v235
  %v347 = vadd.f32 %v311, %v316
  %v348 = vadd.f32 %v321, %v326
  %v349 = vadd.f32 %v331, %v336
  %v350 = vadd.f32 %v341, %v346
  %v351 = vadd.f32 %v347, %v348
  %v352 = vadd.f32 %v349, %v350
  %v353 = vadd.f32 %v351, %v352
  %v355 = vrot.slane %v353, 7
  %v357 = vadd.f32 %v27, %v355
  %v358 = vtanh.pop %v357
  %360 = vset.pattern.permute.xlu0 11
  %361 = vperm.xlu0 %360, %v358
  %v362 = vpop.permute.xlu0 %361
  %v364 = vrot.slane %v25, 6
  %v366 = vmul.f32 %v362, %v364
  %v367 = vadd.f32 %v357, %v366
  %v368 = vtanh.pop %v367
  %370 = vset.pattern.permute.xlu0 12
  %371 = vperm.xlu0 %370, %v368
  %v372 = vpop.permute.xlu0 %371
  %v374 = vmul.f32 %v372, %v262
  %v375 = vadd.f32 %v367, %v374
  %v376 = vtanh.pop %v375
  %378 = vset.pattern.permute.xlu0 13
  %379 = vperm.xlu0 %378, %v376
  %v380 = vpop.permute.xlu0 %379
  %v382 = vmul.f32 %v380, %v25
  %v383 = vadd.f32 %v375, %v382
  %v384 = vtanh.pop %v383
  %386 = vset.pattern.permute.xlu0 14
  %387 = vperm.xlu0 %386, %v384
  %v388 = vpop.permute.xlu0 %387
  %v390 = vmul.f32 %v388, %v145
  %v391 = vadd.f32 %v383, %v390
  %v392 = vtanh.pop %v391
  %394 = vset.pattern.permute.xlu0 15
  %395 = vperm.xlu0 %394, %v392
  %v396 = vpop.permute.xlu0 %395
  %v398 = vmul.f32 %v396, %v155
  %v399 = vadd.f32 %v391, %v398
  %v400 = vtanh.pop %v399
  %402 = vset.pattern.permute.xlu0 16
  %403 = vperm.xlu0 %402, %v400
  %v404 = vpop.permute.xlu0 %403
  %v406 = vmul.f32 %v404, %v165
  %v407 = vadd.f32 %v399, %v406
  %409 = vset.pattern.permute.xlu0 0
  %410 = vperm.xlu0 %409, %v407
  %v411 = vpop.permute.xlu0 %410
  %v413 = vmul.f32 %v411, %v235
  %414 = vset.pattern.permute.xlu0 1
  %415 = vperm.xlu0 %414, %v407
  %v416 = vpop.permute.xlu0 %415
  %v418 = vmul.f32 %v416, %v242
  %419 = vset.pattern.permute.xlu0 2
  %420 = vperm.xlu0 %419, %v407
  %v421 = vpop.permute.xlu0 %420
  %v423 = vmul.f32 %v421, %v24
  %424 = vset.pattern.permute.xlu0 3
  %425 = vperm.xlu0 %424, %v407
  %v426 = vpop.permute.xlu0 %425
  %v428 = vmul.f32 %v426, %v200
  %429 = vset.pattern.permute.xlu0 4
  %430 = vperm.xlu0 %429, %v407
  %v431 = vpop.permute.xlu0 %430
  %v433 = vmul.f32 %v431, %v207
  %434 = vset.pattern.permute.xlu0 5
  %435 = vperm.xlu0 %434, %v407
  %v436 = vpop.permute.xlu0 %435
  %v438 = vmul.f32 %v436, %v214
  %439 = vset.pattern.permute.xlu0 6
  %440 = vperm.xlu0 %439, %v407
  %v441 = vpop.permute.xlu0 %440
  %v443 = vmul.f32 %v441, %v221
  %444 = vset.pattern.permute.xlu0 7
  %445 = vperm.xlu0 %444, %v407
  %v446 = vpop.permute.xlu0 %445
  %v448 = vmul.f32 %v446, %v228
  %v449 = vadd.f32 %v413, %v418
  %v450 = vadd.f32 %v423, %v428
  %v451 = vadd.f32 %v433, %v438
  %v452 = vadd.f32 %v443, %v448
  %v453 = vadd.f32 %v449, %v450
  %v454 = vadd.f32 %v451, %v452
  %v455 = vadd.f32 %v453, %v454
  %v457 = vrot.slane %v455, 7
  %v459 = vadd.f32 %v27, %v457
  %v460 = vtanh.pop %v459
  %462 = vset.pattern.permute.xlu0 11
  %463 = vperm.xlu0 %462, %v460
  %v464 = vpop.permute.xlu0 %463
  %v466 = vmul.f32 %v464, %v185
  %v467 = vadd.f32 %v459, %v466
  %v468 = vtanh.pop %v467
  %470 = vset.pattern.permute.xlu0 12
  %471 = vperm.xlu0 %470, %v468
  %v472 = vpop.permute.xlu0 %471
  %v474 = vmul.f32 %v472, %v364
  %v475 = vadd.f32 %v467, %v474
  %v476 = vtanh.pop %v475
  %478 = vset.pattern.permute.xlu0 13
  %479 = vperm.xlu0 %478, %v476
  %v480 = vpop.permute.xlu0 %479
  %v482 = vmul.f32 %v480, %v262
  %v483 = vadd.f32 %v475, %v482
  %v484 = vtanh.pop %v483
  %486 = vset.pattern.permute.xlu0 14
  %487 = vperm.xlu0 %486, %v484
  %v488 = vpop.permute.xlu0 %487
  %v490 = vmul.f32 %v488, %v25
  %v491 = vadd.f32 %v483, %v490
  %v492 = vtanh.pop %v491
  %494 = vset.pattern.permute.xlu0 15
  %495 = vperm.xlu0 %494, %v492
  %v496 = vpop.permute.xlu0 %495
  %v498 = vmul.f32 %v496, %v145
  %v499 = vadd.f32 %v491, %v498
  %v500 = vtanh.pop %v499
  %502 = vset.pattern.permute.xlu0 16
  %503 = vperm.xlu0 %502, %v500
  %v504 = vpop.permute.xlu0 %503
  %v506 = vmul.f32 %v504, %v155
  %v507 = vadd.f32 %v499, %v506
  %509 = vset.pattern.permute.xlu0 0
  %510 = vperm.xlu0 %509, %v507
  %v511 = vpop.permute.xlu0 %510
  %v513 = vmul.f32 %v511, %v228
  %514 = vset.pattern.permute.xlu0 1
  %515 = vperm.xlu0 %514, %v507
  %v516 = vpop.permute.xlu0 %515
  %v518 = vmul.f32 %v516, %v235
  %519 = vset.pattern.permute.xlu0 2
  %520 = vperm.xlu0 %519, %v507
  %v521 = vpop.permute.xlu0 %520
  %v523 = vmul.f32 %v521, %v242
  %524 = vset.pattern.permute.xlu0 3
  %525 = vperm.xlu0 %524, %v507
  %v526 = vpop.permute.xlu0 %525
  %v528 = vmul.f32 %v526, %v24
  %529 = vset.pattern.permute.xlu0 4
  %530 = vperm.xlu0 %529, %v507
  %v531 = vpop.permute.xlu0 %530
  %v533 = vmul.f32 %v531, %v200
  %534 = vset.pattern.permute.xlu0 5
  %535 = vperm.xlu0 %534, %v507
  %v536 = vpop.permute.xlu0 %535
  %v538 = vmul.f32 %v536, %v207
  %539 = vset.pattern.permute.xlu0 6
  %540 = vperm.xlu0 %539, %v507
  %v541 = vpop.permute.xlu0 %540
  %v543 = vmul.f32 %v541, %v214
  %544 = vset.pattern.permute.xlu0 7
  %545 = vperm.xlu0 %544, %v507
  %v546 = vpop.permute.xlu0 %545
  %v548 = vmul.f32 %v546, %v221
  %v549 = vadd.f32 %v513, %v518
  %v550 = vadd.f32 %v523, %v528
  %v551 = vadd.f32 %v533, %v538
  %v552 = vadd.f32 %v543, %v548
  %v553 = vadd.f32 %v549, %v550
  %v554 = vadd.f32 %v551, %v552
  %v555 = vadd.f32 %v553, %v554
  %v557 = vrot.slane %v555, 7
  %v559 = vadd.f32 %v27, %v557
  %v560 = vtanh.pop %v559
  %562 = vset.pattern.permute.xlu0 11
  %563 = vperm.xlu0 %562, %v560
  %v564 = vpop.permute.xlu0 %563
  %v566 = vmul.f32 %v564, %v175
  %v567 = vadd.f32 %v559, %v566
  %v568 = vtanh.pop %v567
  %570 = vset.pattern.permute.xlu0 12
  %571 = vperm.xlu0 %570, %v568
  %v572 = vpop.permute.xlu0 %571
  %v574 = vmul.f32 %v572, %v185
  %v575 = vadd.f32 %v567, %v574
  %v576 = vtanh.pop %v575
  %578 = vset.pattern.permute.xlu0 13
  %579 = vperm.xlu0 %578, %v576
  %v580 = vpop.permute.xlu0 %579
  %v582 = vmul.f32 %v580, %v364
  %v583 = vadd.f32 %v575, %v582
  %v584 = vtanh.pop %v583
  %586 = vset.pattern.permute.xlu0 14
  %587 = vperm.xlu0 %586, %v584
  %v588 = vpop.permute.xlu0 %587
  %v590 = vmul.f32 %v588, %v262
  %v591 = vadd.f32 %v583, %v590
  %v592 = vtanh.pop %v591
  %594 = vset.pattern.permute.xlu0 15
  %595 = vperm.xlu0 %594, %v592
  %v596 = vpop.permute.xlu0 %595
  %v598 = vmul.f32 %v596, %v25
  %v599 = vadd.f32 %v591, %v598
  %v600 = vtanh.pop %v599
  %602 = vset.pattern.permute.xlu0 16
  %603 = vperm.xlu0 %602, %v600
  %v604 = vpop.permute.xlu0 %603
  %v606 = vmul.f32 %v604, %v145
  %v607 = vadd.f32 %v599, %v606
  %609 = vset.pattern.permute.xlu0 0
  %610 = vperm.xlu0 %609, %v607
  %v611 = vpop.permute.xlu0 %610
  %v613 = vmul.f32 %v611, %v221
  %614 = vset.pattern.permute.xlu0 1
  %615 = vperm.xlu0 %614, %v607
  %v616 = vpop.permute.xlu0 %615
  %v618 = vmul.f32 %v616, %v228
  %619 = vset.pattern.permute.xlu0 2
  %620 = vperm.xlu0 %619, %v607
  %v621 = vpop.permute.xlu0 %620
  %v623 = vmul.f32 %v621, %v235
  %624 = vset.pattern.permute.xlu0 3
  %625 = vperm.xlu0 %624, %v607
  %v626 = vpop.permute.xlu0 %625
  %v628 = vmul.f32 %v626, %v242
  %629 = vset.pattern.permute.xlu0 4
  %630 = vperm.xlu0 %629, %v607
  %v631 = vpop.permute.xlu0 %630
  %v633 = vmul.f32 %v631, %v24
  %634 = vset.pattern.permute.xlu0 5
  %635 = vperm.xlu0 %634, %v607
  %v636 = vpop.permute.xlu0 %635
  %v638 = vmul.f32 %v636, %v200
  %639 = vset.pattern.permute.xlu0 6
  %640 = vperm.xlu0 %639, %v607
  %v641 = vpop.permute.xlu0 %640
  %v643 = vmul.f32 %v641, %v207
  %644 = vset.pattern.permute.xlu0 7
  %645 = vperm.xlu0 %644, %v607
  %v646 = vpop.permute.xlu0 %645
  %v648 = vmul.f32 %v646, %v214
  %v649 = vadd.f32 %v613, %v618
  %v650 = vadd.f32 %v623, %v628
  %v651 = vadd.f32 %v633, %v638
  %v652 = vadd.f32 %v643, %v648
  %v653 = vadd.f32 %v649, %v650
  %v654 = vadd.f32 %v651, %v652
  %v655 = vadd.f32 %v653, %v654
  %v657 = vrot.slane %v655, 7
  %v659 = vadd.f32 %v27, %v657
  %v660 = vtanh.pop %v659
  %662 = vset.pattern.permute.xlu0 11
  %663 = vperm.xlu0 %662, %v660
  %v664 = vpop.permute.xlu0 %663
  %v666 = vmul.f32 %v664, %v165
  %v667 = vadd.f32 %v659, %v666
  %v668 = vtanh.pop %v667
  %670 = vset.pattern.permute.xlu0 12
  %671 = vperm.xlu0 %670, %v668
  %v672 = vpop.permute.xlu0 %671
  %v674 = vmul.f32 %v672, %v175
  %v675 = vadd.f32 %v667, %v674
  %v676 = vtanh.pop %v675
  %678 = vset.pattern.permute.xlu0 13
  %679 = vperm.xlu0 %678, %v676
  %v680 = vpop.permute.xlu0 %679
  %v682 = vmul.f32 %v680, %v185
  %v683 = vadd.f32 %v675, %v682
  %v684 = vtanh.pop %v683
  %686 = vset.pattern.permute.xlu0 14
  %687 = vperm.xlu0 %686, %v684
  %v688 = vpop.permute.xlu0 %687
  %v690 = vmul.f32 %v688, %v364
  %v691 = vadd.f32 %v683, %v690
  %v692 = vtanh.pop %v691
  %694 = vset.pattern.permute.xlu0 15
  %695 = vperm.xlu0 %694, %v692
  %v696 = vpop.permute.xlu0 %695
  %v698 = vmul.f32 %v696, %v262
  %v699 = vadd.f32 %v691, %v698
  %v700 = vtanh.pop %v699
  %702 = vset.pattern.permute.xlu0 16
  %703 = vperm.xlu0 %702, %v700
  %v704 = vpop.permute.xlu0 %703
  %v706 = vmul.f32 %v704, %v25
  %v707 = vadd.f32 %v699, %v706
  %709 = vset.pattern.permute.xlu0 0
  %710 = vperm.xlu0 %709, %v707
  %v711 = vpop.permute.xlu0 %710
  %v713 = vmul.f32 %v711, %v214
  %714 = vset.pattern.permute.xlu0 1
  %715 = vperm.xlu0 %714, %v707
  %v716 = vpop.permute.xlu0 %715
  %v718 = vmul.f32 %v716, %v221
  %719 = vset.pattern.permute.xlu0 2
  %720 = vperm.xlu0 %719, %v707
  %v721 = vpop.permute.xlu0 %720
  %v723 = vmul.f32 %v721, %v228
  %724 = vset.pattern.permute.xlu0 3
  %725 = vperm.xlu0 %724, %v707
  %v726 = vpop.permute.xlu0 %725
  %v728 = vmul.f32 %v726, %v235
  %729 = vset.pattern.permute.xlu0 4
  %730 = vperm.xlu0 %729, %v707
  %v731 = vpop.permute.xlu0 %730
  %v733 = vmul.f32 %v731, %v242
  %734 = vset.pattern.permute.xlu0 5
  %735 = vperm.xlu0 %734, %v707
  %v736 = vpop.permute.xlu0 %735
  %v738 = vmul.f32 %v736, %v24
  %739 = vset.pattern.permute.xlu0 6
  %740 = vperm.xlu0 %739, %v707
  %v741 = vpop.permute.xlu0 %740
  %v743 = vmul.f32 %v741, %v200
  %744 = vset.pattern.permute.xlu0 7
  %745 = vperm.xlu0 %744, %v707
  %v746 = vpop.permute.xlu0 %745
  %v748 = vmul.f32 %v746, %v207
  %v749 = vadd.f32 %v713, %v718
  %v750 = vadd.f32 %v723, %v728
  %v751 = vadd.f32 %v733, %v738
  %v752 = vadd.f32 %v743, %v748
  %v753 = vadd.f32 %v749, %v750
  %v754 = vadd.f32 %v751, %v752
  %v755 = vadd.f32 %v753, %v754
  %v757 = vrot.slane %v755, 7
  %v759 = vadd.f32 %v27, %v757
  %v760 = vtanh.pop %v759
  %762 = vset.pattern.permute.xlu0 11
  %763 = vperm.xlu0 %762, %v760
  %v764 = vpop.permute.xlu0 %763
  %v766 = vmul.f32 %v764, %v155
  %v767 = vadd.f32 %v759, %v766
  %v768 = vtanh.pop %v767
  %770 = vset.pattern.permute.xlu0 12
  %771 = vperm.xlu0 %770, %v768
  %v772 = vpop.permute.xlu0 %771
  %v774 = vmul.f32 %v772, %v165
  %v775 = vadd.f32 %v767, %v774
  %v776 = vtanh.pop %v775
  %778 = vset.pattern.permute.xlu0 13
  %779 = vperm.xlu0 %778, %v776
  %v780 = vpop.permute.xlu0 %779
  %v782 = vmul.f32 %v780, %v175
  %v783 = vadd.f32 %v775, %v782
  %v784 = vtanh.pop %v783
  %786 = vset.pattern.permute.xlu0 14
  %787 = vperm.xlu0 %786, %v784
  %v788 = vpop.permute.xlu0 %787
  %v790 = vmul.f32 %v788, %v185
  %v791 = vadd.f32 %v783, %v790
  %v792 = vtanh.pop %v791
  %794 = vset.pattern.permute.xlu0 15
  %795 = vperm.xlu0 %794, %v792
  %v796 = vpop.permute.xlu0 %795
  %v798 = vmul.f32 %v796, %v364
  %v799 = vadd.f32 %v791, %v798
  %v800 = vtanh.pop %v799
  %802 = vset.pattern.permute.xlu0 16
  %803 = vperm.xlu0 %802, %v800
  %v804 = vpop.permute.xlu0 %803
  %v806 = vmul.f32 %v804, %v262
  %v807 = vadd.f32 %v799, %v806
  %809 = vset.pattern.permute.xlu0 0
  %810 = vperm.xlu0 %809, %v807
  %v811 = vpop.permute.xlu0 %810
  %v813 = vmul.f32 %v811, %v207
  %814 = vset.pattern.permute.xlu0 1
  %815 = vperm.xlu0 %814, %v807
  %v816 = vpop.permute.xlu0 %815
  %v818 = vmul.f32 %v816, %v214
  %819 = vset.pattern.permute.xlu0 2
  %820 = vperm.xlu0 %819, %v807
  %v821 = vpop.permute.xlu0 %820
  %v823 = vmul.f32 %v821, %v221
  %824 = vset.pattern.permute.xlu0 3
  %825 = vperm.xlu0 %824, %v807
  %v826 = vpop.permute.xlu0 %825
  %v828 = vmul.f32 %v826, %v228
  %829 = vset.pattern.permute.xlu0 4
  %830 = vperm.xlu0 %829, %v807
  %v831 = vpop.permute.xlu0 %830
  %v833 = vmul.f32 %v831, %v235
  %834 = vset.pattern.permute.xlu0 5
  %835 = vperm.xlu0 %834, %v807
  %v836 = vpop.permute.xlu0 %835
  %v838 = vmul.f32 %v836, %v242
  %839 = vset.pattern.permute.xlu0 6
  %840 = vperm.xlu0 %839, %v807
  %v841 = vpop.permute.xlu0 %840
  %v843 = vmul.f32 %v841, %v24
  %844 = vset.pattern.permute.xlu0 7
  %845 = vperm.xlu0 %844, %v807
  %v846 = vpop.permute.xlu0 %845
  %v848 = vmul.f32 %v846, %v200
  %v849 = vadd.f32 %v813, %v818
  %v850 = vadd.f32 %v823, %v828
  %v851 = vadd.f32 %v833, %v838
  %v852 = vadd.f32 %v843, %v848
  %v853 = vadd.f32 %v849, %v850
  %v854 = vadd.f32 %v851, %v852
  %v855 = vadd.f32 %v853, %v854
  %v857 = vrot.slane %v855, 7
  %v859 = vadd.f32 %v27, %v857
  %v860 = vtanh.pop %v859
  %862 = vset.pattern.permute.xlu0 11
  %863 = vperm.xlu0 %862, %v860
  %v864 = vpop.permute.xlu0 %863
  %v866 = vmul.f32 %v864, %v145
  %v867 = vadd.f32 %v859, %v866
  %v868 = vtanh.pop %v867
  %870 = vset.pattern.permute.xlu0 12
  %871 = vperm.xlu0 %870, %v868
  %v872 = vpop.permute.xlu0 %871
  %v874 = vmul.f32 %v872, %v155
  %v875 = vadd.f32 %v867, %v874
  %v876 = vtanh.pop %v875
  %878 = vset.pattern.permute.xlu0 13
  %879 = vperm.xlu0 %878, %v876
  %v880 = vpop.permute.xlu0 %879
  %v882 = vmul.f32 %v880, %v165
  %v883 = vadd.f32 %v875, %v882
  %v884 = vtanh.pop %v883
  %886 = vset.pattern.permute.xlu0 14
  %887 = vperm.xlu0 %886, %v884
  %v888 = vpop.permute.xlu0 %887
  %v890 = vmul.f32 %v888, %v175
  %v891 = vadd.f32 %v883, %v890
  %v892 = vtanh.pop %v891
  %894 = vset.pattern.permute.xlu0 15
  %895 = vperm.xlu0 %894, %v892
  %v896 = vpop.permute.xlu0 %895
  %v898 = vmul.f32 %v896, %v185
  %v899 = vadd.f32 %v891, %v898
  %v900 = vtanh.pop %v899
  %902 = vset.pattern.permute.xlu0 16
  %903 = vperm.xlu0 %902, %v900
  %v904 = vpop.permute.xlu0 %903
  %v906 = vmul.f32 %v904, %v364
  %v907 = vadd.f32 %v899, %v906
  %vm908 = vcmask 1040384
  %v909 = vsel %vm908, %v188, %v305
  %vm910 = vcmask 1041408
  %v911 = vsel %vm910, %v909, %v407
  %vm912 = vcmask 1042432
  %v913 = vsel %vm912, %v911, %v507
  %vm914 = vcmask 1043456
  %v915 = vsel %vm914, %v913, %v607
  %vm916 = vcmask 1044480
  %v917 = vsel %vm916, %v915, %v707
  %vm918 = vcmask 1045504
  %v919 = vsel %vm918, %v917, %v807
  %vm920 = vcmask 1046528
  %v921 = vsel %vm920, %v919, %v907
  %vm922 = vcmask 89088
  %923 = vst.msk [vmem:[%s4] sm:$0xff] %vm922, %v921
  %vm924 = vcmask 64519
  %925 = vst.msk [vmem:[#allocation2 - $0x7] sm:$0x80] %vm924, %v907
  // Predicated region
  $region22: #{_ren_rollout.1} parent=0 // pred_check
    _
  $region23: #{_ren_rollout.1} parent=0 // pred_check_branch
    %927 = sbr.rel (0) target = $region25
  $region24: #{_ren_rollout.1} parent=0 // pred_region
    _
  $region25: #{_ren_rollout.1} parent=0 // pred_fallthru
    _
  // Predicated region
  $region26: #{_ren_rollout.1} parent=0 // pred_check
    _
  $region27: #{_ren_rollout.1} parent=0 // pred_check_branch
    %929 = sbr.rel (0) target = $region29
  $region28: #{_ren_rollout.1} parent=0 // pred_region
    _
  $region29: #{_ren_rollout.1} parent=0 // pred_fallthru
    _

</llo_original>
